<compile_context>
chip_gen: v5e
topology: v5e:2x2
jax: 0.10.0
libtpu: 0.0.40
codegen_flags: <defaults>
</compile_context>

<pallas_src>
import functools
import math

import jax
import jax.numpy as jnp
from jax.experimental import pallas as pl
from jax.experimental.pallas import tpu as pltpu  # noqa: F401  (imported per convention)

# ---------------- small synthetic BERT config ----------------
VOCAB = 64
TYPE_VOCAB = 2
MAX_POS = 32
HIDDEN = 32
HEADS = 2
HEAD_DIM = HIDDEN // HEADS
INTERMEDIATE = 64
LAYERS = 2
CLASS_SIZE = 2
LN_EPS = 1e-12          # BERT default layer_norm_eps
MASK_NEG = -10000.0     # classic BERT extended attention mask value


# ---------------- in-kernel math helpers ----------------
def _erf(x):
    # Abramowitz & Stegun 7.1.26 polynomial (|err| < 1.5e-7).
    a1, a2, a3, a4, a5 = 0.254829592, -0.284496736, 1.421413741, -1.453152027, 1.061405429
    p = 0.3275911
    s = jnp.where(x >= 0.0, 1.0, -1.0)
    ax = jnp.abs(x)
    t = 1.0 / (1.0 + p * ax)
    poly = ((((a5 * t + a4) * t + a3) * t + a2) * t + a1) * t
    return s * (1.0 - poly * jnp.exp(-ax * ax))


def _gelu(x):
    # exact (erf-based) GELU, matching BERT's hidden_act="gelu"
    return 0.5 * x * (1.0 + _erf(x * (1.0 / math.sqrt(2.0))))


def _layernorm(x, g, b):
    mu = jnp.mean(x, axis=-1, keepdims=True)
    xc = x - mu
    var = jnp.mean(xc * xc, axis=-1, keepdims=True)
    return xc * jax.lax.rsqrt(var + LN_EPS) * g + b


# ---------------- the fused kernel ----------------
def bert_encoder_kernel(emb_ref, mask_ref,
                        eln_g_ref, eln_b_ref,
                        qkv_w_ref, qkv_b_ref, ao_w_ref, ao_b_ref,
                        aln_g_ref, aln_b_ref, i_w_ref, i_b_ref,
                        o_w_ref, o_b_ref, oln_g_ref, oln_b_ref,
                        pool_w_ref, pool_b_ref, cls_w_ref, cls_b_ref,
                        logits_ref):
    B = mask_ref.shape[0]
    S = mask_ref.shape[2]

    # --- embeddings LayerNorm (residual-free) ---
    h = _layernorm(emb_ref[...], eln_g_ref[...], eln_b_ref[...])      # (B*S, H)

    # --- encoder layers (statically unrolled) ---
    for l in range(LAYERS):
        qkv_w = qkv_w_ref[l]                                          # (H, 3H)
        ao_w = ao_w_ref[l]                                            # (H, H)

        # fused Q/K/V projection (scale already folded into Q weights)
        qkv = jnp.dot(h, qkv_w, preferred_element_type=jnp.float32) + qkv_b_ref[l]
        q = qkv[:, 0:HIDDEN]
        k = qkv[:, HIDDEN:2 * HIDDEN]
        v = qkv[:, 2 * HIDDEN:3 * HIDDEN]

        rows = []
        for b in range(B):
            r0 = b * S
            mb = mask_ref[b]                                          # (1, S) additive bias
            acc = None
            for hd in range(HEADS):
                c0 = hd * HEAD_DIM
                qh = q[r0:r0 + S, c0:c0 + HEAD_DIM]                   # (S, Dh)
                kh = k[r0:r0 + S, c0:c0 + HEAD_DIM]
                vh = v[r0:r0 + S, c0:c0 + HEAD_DIM]
                # q @ k^T without materializing a transpose of k
                scores = jax.lax.dot_general(
                    qh, kh, (((1,), (1,)), ((), ())),
                    preferred_element_type=jnp.float32)               # (S, S)
                scores = scores + mb
                scores = scores - jnp.max(scores, axis=-1, keepdims=True)
                p = jnp.exp(scores)
                p = p * pl.reciprocal(jnp.sum(p, axis=-1, keepdims=True), approx=True)
                ctx_h = jnp.dot(p, vh, preferred_element_type=jnp.float32)   # (S, Dh)
                # fold this head's context straight into the output projection
                part = jnp.dot(ctx_h, ao_w[c0:c0 + HEAD_DIM, :],
                               preferred_element_type=jnp.float32)    # (S, H)
                acc = part if acc is None else acc + part
            rows.append(acc)
        attn_out = jnp.concatenate(rows, axis=0) + ao_b_ref[l]        # (B*S, H)

        # add & LayerNorm
        h1 = _layernorm(attn_out + h, aln_g_ref[l], aln_b_ref[l])

        # feed-forward (GELU) + add & LayerNorm
        inter = _gelu(jnp.dot(h1, i_w_ref[l], preferred_element_type=jnp.float32)
                      + i_b_ref[l])                                   # (B*S, I)
        ffn = jnp.dot(inter, o_w_ref[l], preferred_element_type=jnp.float32) + o_b_ref[l]
        h = _layernorm(ffn + h1, oln_g_ref[l], oln_b_ref[l])

    # --- pooler (tanh on [CLS]) + classifier, fused ---
    # Gather the [CLS] rows (row b*S for each batch) with a tiny selection
    # matmul built from 2-D iotas; avoids unaligned sublane slicing/concat.
    col_ids = jax.lax.broadcasted_iota(jnp.int32, (B, B * S), 1)
    row_ids = jax.lax.broadcasted_iota(jnp.int32, (B, B * S), 0)
    sel = (col_ids == row_ids * S).astype(jnp.float32)                # (B, B*S)
    cls_tok = jnp.dot(sel, h, preferred_element_type=jnp.float32)     # (B, H)

    pooled = jnp.tanh(jnp.dot(cls_tok, pool_w_ref[...],
                              preferred_element_type=jnp.float32) + pool_b_ref[...])
    logits_ref[...] = (jnp.dot(pooled, cls_w_ref[...],
                               preferred_element_type=jnp.float32) + cls_b_ref[...])


# ---------------- parameter construction (deterministic, synthetic) ----------------
def _normal(key, shape, std=0.02):
    return (std * jax.random.normal(key, shape)).astype(jnp.float32)


def init_params(seed=0):
    key = jax.random.PRNGKey(seed)
    ks = iter(jax.random.split(key, 8 + LAYERS * 16))
    scale = 1.0 / math.sqrt(HEAD_DIM)

    p = {
        "word_emb": _normal(next(ks), (VOCAB, HIDDEN)),
        "pos_emb": _normal(next(ks), (MAX_POS, HIDDEN)),
        "type_emb": _normal(next(ks), (TYPE_VOCAB, HIDDEN)),
        "emb_ln_g": jnp.ones((1, HIDDEN), jnp.float32),
        "emb_ln_b": jnp.zeros((1, HIDDEN), jnp.float32),
        "pool_w": _normal(next(ks), (HIDDEN, HIDDEN)),
        "pool_b": jnp.zeros((1, HIDDEN), jnp.float32),
        "cls_w": _normal(next(ks), (HIDDEN, CLASS_SIZE)),
        "cls_b": jnp.zeros((1, CLASS_SIZE), jnp.float32),
    }

    qkv_w, qkv_b, ao_w, ao_b = [], [], [], []
    aln_g, aln_b, i_w, i_b, o_w, o_b, oln_g, oln_b = [], [], [], [], [], [], [], []
    for _ in range(LAYERS):
        qw = _normal(next(ks), (HIDDEN, HIDDEN))
        kw = _normal(next(ks), (HIDDEN, HIDDEN))
        vw = _normal(next(ks), (HIDDEN, HIDDEN))
        qb = jnp.zeros((HIDDEN,), jnp.float32)
        kb = jnp.zeros((HIDDEN,), jnp.float32)
        vb = jnp.zeros((HIDDEN,), jnp.float32)
        # fuse QKV into one (H, 3H) weight; fold attention scale into Q part
        qkv_w.append(jnp.concatenate([qw * scale, kw, vw], axis=1))
        qkv_b.append(jnp.concatenate([qb * scale, kb, vb])[None, :])          # (1, 3H)
        ao_w.append(_normal(next(ks), (HIDDEN, HIDDEN)))
        ao_b.append(jnp.zeros((1, HIDDEN), jnp.float32))
        aln_g.append(jnp.ones((1, HIDDEN), jnp.float32))
        aln_b.append(jnp.zeros((1, HIDDEN), jnp.float32))
        i_w.append(_normal(next(ks), (HIDDEN, INTERMEDIATE)))
        i_b.append(jnp.zeros((1, INTERMEDIATE), jnp.float32))
        o_w.append(_normal(next(ks), (INTERMEDIATE, HIDDEN)))
        o_b.append(jnp.zeros((1, HIDDEN), jnp.float32))
        oln_g.append(jnp.ones((1, HIDDEN), jnp.float32))
        oln_b.append(jnp.zeros((1, HIDDEN), jnp.float32))

    p.update({
        "qkv_w": jnp.stack(qkv_w), "qkv_b": jnp.stack(qkv_b),
        "ao_w": jnp.stack(ao_w), "ao_b": jnp.stack(ao_b),
        "aln_g": jnp.stack(aln_g), "aln_b": jnp.stack(aln_b),
        "i_w": jnp.stack(i_w), "i_b": jnp.stack(i_b),
        "o_w": jnp.stack(o_w), "o_b": jnp.stack(o_b),
        "oln_g": jnp.stack(oln_g), "oln_b": jnp.stack(oln_b),
    })
    return p


# ---------------- model forward ----------------
def _full_spec(shape):
    rank = len(shape)
    return pl.BlockSpec(shape, lambda i, _r=rank: (0,) * _r)


@jax.jit
def bert_sst2_forward(params, input_ids, token_type_ids, attention_mask):
    B, S = input_ids.shape

    # --- embeddings (gathers are glue; LayerNorm happens in-kernel) ---
    positions = jnp.arange(S)
    emb = (jnp.take(params["word_emb"], input_ids, axis=0)
           + jnp.take(params["type_emb"], token_type_ids, axis=0)
           + jnp.take(params["pos_emb"], positions, axis=0)[None, :, :])
    emb2d = emb.reshape(B * S, HIDDEN)

    # extended additive attention mask, one (1, S) row per batch;
    # broadcast over heads/queries is done inside the kernel.
    mask_bias = ((1.0 - attention_mask.astype(jnp.float32)) * MASK_NEG).reshape(B, 1, S)

    args = (emb2d, mask_bias,
            params["emb_ln_g"], params["emb_ln_b"],
            params["qkv_w"], params["qkv_b"],
            params["ao_w"], params["ao_b"],
            params["aln_g"], params["aln_b"],
            params["i_w"], params["i_b"],
            params["o_w"], params["o_b"],
            params["oln_g"], params["oln_b"],
            params["pool_w"], params["pool_b"],
            params["cls_w"], params["cls_b"])

    return pl.pallas_call(
        bert_encoder_kernel,
        out_shape=jax.ShapeDtypeStruct((B, CLASS_SIZE), jnp.float32),
        grid=(1,),
        in_specs=[_full_spec(a.shape) for a in args],
        out_specs=_full_spec((B, CLASS_SIZE)),
    )(*args)


# ---------------- main ----------------
if __name__ == "__main__":
    B, S = 2, 8
    key = jax.random.PRNGKey(0)
    k1, k2, _ = jax.random.split(key, 3)

    input_ids = jax.random.randint(k1, (B, S), 0, VOCAB, dtype=jnp.int32)
    token_type_ids = jax.random.randint(k2, (B, S), 0, TYPE_VOCAB, dtype=jnp.int32)
    # last two tokens of the second example are padding
    attention_mask = jnp.ones((B, S), jnp.int32).at[1, -2:].set(0)

    params = init_params(seed=0)
    logits = bert_sst2_forward(params, input_ids, token_type_ids, attention_mask)
    jax.block_until_ready(logits)
    assert logits.shape == (B, CLASS_SIZE)
    assert bool(jnp.all(jnp.isfinite(logits)))
    print("KERNEL_OK")
</pallas_src>

<mosaic_0001>
module attributes {stable_mosaic.version = 11 : i64} {
  func.func @bert_encoder_kernel(%arg0: i32, %arg1: memref<16x32xf32, #tpu.memory_space<vmem>>, %arg2: memref<2x1x8xf32, #tpu.memory_space<vmem>>, %arg3: memref<1x32xf32, #tpu.memory_space<vmem>>, %arg4: memref<1x32xf32, #tpu.memory_space<vmem>>, %arg5: memref<2x32x96xf32, #tpu.memory_space<vmem>>, %arg6: memref<2x1x96xf32, #tpu.memory_space<vmem>>, %arg7: memref<2x32x32xf32, #tpu.memory_space<vmem>>, %arg8: memref<2x1x32xf32, #tpu.memory_space<vmem>>, %arg9: memref<2x1x32xf32, #tpu.memory_space<vmem>>, %arg10: memref<2x1x32xf32, #tpu.memory_space<vmem>>, %arg11: memref<2x32x64xf32, #tpu.memory_space<vmem>>, %arg12: memref<2x1x64xf32, #tpu.memory_space<vmem>>, %arg13: memref<2x64x32xf32, #tpu.memory_space<vmem>>, %arg14: memref<2x1x32xf32, #tpu.memory_space<vmem>>, %arg15: memref<2x1x32xf32, #tpu.memory_space<vmem>>, %arg16: memref<2x1x32xf32, #tpu.memory_space<vmem>>, %arg17: memref<32x32xf32, #tpu.memory_space<vmem>>, %arg18: memref<1x32xf32, #tpu.memory_space<vmem>>, %arg19: memref<32x2xf32, #tpu.memory_space<vmem>>, %arg20: memref<1x2xf32, #tpu.memory_space<vmem>>, %arg21: memref<2x2xf32, #tpu.memory_space<vmem>>) attributes {dimension_semantics = [#tpu.dimension_semantics<arbitrary>], iteration_bounds = array<i64: 1>, scalar_prefetch = 0 : i64, scratch_operands = 0 : i64, tpu.core_type = #tpu.core_type<tc>, window_params = [{pipeline_mode = #tpu.pipeline_mode<synchronous>, transform_indices = @transform_0, window_bounds = array<i64: 16, 32>}, {pipeline_mode = #tpu.pipeline_mode<synchronous>, transform_indices = @transform_1, window_bounds = array<i64: 2, 1, 8>}, {pipeline_mode = #tpu.pipeline_mode<synchronous>, transform_indices = @transform_2, window_bounds = array<i64: 1, 32>}, {pipeline_mode = #tpu.pipeline_mode<synchronous>, transform_indices = @transform_3, window_bounds = array<i64: 1, 32>}, {pipeline_mode = #tpu.pipeline_mode<synchronous>, transform_indices = @transform_4, window_bounds = array<i64: 2, 32, 96>}, {pipeline_mode = #tpu.pipeline_mode<synchronous>, transform_indices = @transform_5, window_bounds = array<i64: 2, 1, 96>}, {pipeline_mode = #tpu.pipeline_mode<synchronous>, transform_indices = @transform_6, window_bounds = array<i64: 2, 32, 32>}, {pipeline_mode = #tpu.pipeline_mode<synchronous>, transform_indices = @transform_7, window_bounds = array<i64: 2, 1, 32>}, {pipeline_mode = #tpu.pipeline_mode<synchronous>, transform_indices = @transform_8, window_bounds = array<i64: 2, 1, 32>}, {pipeline_mode = #tpu.pipeline_mode<synchronous>, transform_indices = @transform_9, window_bounds = array<i64: 2, 1, 32>}, {pipeline_mode = #tpu.pipeline_mode<synchronous>, transform_indices = @transform_10, window_bounds = array<i64: 2, 32, 64>}, {pipeline_mode = #tpu.pipeline_mode<synchronous>, transform_indices = @transform_11, window_bounds = array<i64: 2, 1, 64>}, {pipeline_mode = #tpu.pipeline_mode<synchronous>, transform_indices = @transform_12, window_bounds = array<i64: 2, 64, 32>}, {pipeline_mode = #tpu.pipeline_mode<synchronous>, transform_indices = @transform_13, window_bounds = array<i64: 2, 1, 32>}, {pipeline_mode = #tpu.pipeline_mode<synchronous>, transform_indices = @transform_14, window_bounds = array<i64: 2, 1, 32>}, {pipeline_mode = #tpu.pipeline_mode<synchronous>, transform_indices = @transform_15, window_bounds = array<i64: 2, 1, 32>}, {pipeline_mode = #tpu.pipeline_mode<synchronous>, transform_indices = @transform_16, window_bounds = array<i64: 32, 32>}, {pipeline_mode = #tpu.pipeline_mode<synchronous>, transform_indices = @transform_17, window_bounds = array<i64: 1, 32>}, {pipeline_mode = #tpu.pipeline_mode<synchronous>, transform_indices = @transform_18, window_bounds = array<i64: 32, 2>}, {pipeline_mode = #tpu.pipeline_mode<synchronous>, transform_indices = @transform_19, window_bounds = array<i64: 1, 2>}, {pipeline_mode = #tpu.pipeline_mode<synchronous>, transform_indices = @transform_20, window_bounds = array<i64: 2, 2>}]} {
    %c0 = arith.constant 0 : index
    %c0_0 = arith.constant 0 : index
    %0 = vector.load %arg1[%c0, %c0_0] : memref<16x32xf32, #tpu.memory_space<vmem>>, vector<16x32xf32>
    %c0_1 = arith.constant 0 : index
    %c0_2 = arith.constant 0 : index
    %1 = vector.load %arg3[%c0_1, %c0_2] : memref<1x32xf32, #tpu.memory_space<vmem>>, vector<1x32xf32>
    %c0_3 = arith.constant 0 : index
    %c0_4 = arith.constant 0 : index
    %2 = vector.load %arg4[%c0_3, %c0_4] : memref<1x32xf32, #tpu.memory_space<vmem>>, vector<1x32xf32>
    %cst = arith.constant dense<0.000000e+00> : vector<16xf32>
    %3 = vector.multi_reduction <add>, %0, %cst [1] : vector<16x32xf32> to vector<16xf32>
    %4 = vector.shape_cast %3 : vector<16xf32> to vector<16x1xf32>
    %cst_5 = arith.constant 3.200000e+01 : f32
    %5 = vector.broadcast %cst_5 : f32 to vector<16x1xf32>
    %6 = arith.divf %4, %5 : vector<16x1xf32>
    %7 = vector.broadcast %6 : vector<16x1xf32> to vector<16x32xf32>
    %8 = arith.subf %0, %7 : vector<16x32xf32>
    %9 = arith.mulf %8, %8 : vector<16x32xf32>
    %cst_6 = arith.constant dense<0.000000e+00> : vector<16xf32>
    %10 = vector.multi_reduction <add>, %9, %cst_6 [1] : vector<16x32xf32> to vector<16xf32>
    %11 = vector.shape_cast %10 : vector<16xf32> to vector<16x1xf32>
    %cst_7 = arith.constant 3.200000e+01 : f32
    %12 = vector.broadcast %cst_7 : f32 to vector<16x1xf32>
    %13 = arith.divf %11, %12 : vector<16x1xf32>
    %cst_8 = arith.constant 9.99999996E-13 : f32
    %14 = vector.broadcast %cst_8 : f32 to vector<16x1xf32>
    %15 = arith.addf %13, %14 : vector<16x1xf32>
    %16 = math.rsqrt %15 : vector<16x1xf32>
    %17 = vector.broadcast %16 : vector<16x1xf32> to vector<16x32xf32>
    %18 = arith.mulf %8, %17 : vector<16x32xf32>
    %19 = vector.broadcast %1 : vector<1x32xf32> to vector<16x32xf32>
    %20 = arith.mulf %18, %19 : vector<16x32xf32>
    %21 = vector.broadcast %2 : vector<1x32xf32> to vector<16x32xf32>
    %22 = arith.addf %20, %21 : vector<16x32xf32>
    %c0_9 = arith.constant 0 : index
    %c0_10 = arith.constant 0 : index
    %c0_11 = arith.constant 0 : index
    %23 = vector.load %arg5[%c0_9, %c0_10, %c0_11] : memref<2x32x96xf32, #tpu.memory_space<vmem>>, vector<1x32x96xf32>
    %24 = vector.shape_cast %23 : vector<1x32x96xf32> to vector<32x96xf32>
    %c0_12 = arith.constant 0 : index
    %c0_13 = arith.constant 0 : index
    %c0_14 = arith.constant 0 : index
    %25 = vector.load %arg7[%c0_12, %c0_13, %c0_14] : memref<2x32x32xf32, #tpu.memory_space<vmem>>, vector<1x32x32xf32>
    %26 = vector.shape_cast %25 : vector<1x32x32xf32> to vector<32x32xf32>
    %cst_15 = arith.constant dense<0.000000e+00> : vector<16x96xf32>
    %27 = tpu.matmul %22, %24, %cst_15 {dimension_numbers = #tpu.dot_dimension_numbers<[1], [0], [0], [1], [0, 0, 1, 1], [], []>} : vector<16x32xf32>, vector<32x96xf32>, vector<16x96xf32> -> vector<16x96xf32>
    %c0_16 = arith.constant 0 : index
    %c0_17 = arith.constant 0 : index
    %c0_18 = arith.constant 0 : index
    %28 = vector.load %arg6[%c0_16, %c0_17, %c0_18] : memref<2x1x96xf32, #tpu.memory_space<vmem>>, vector<1x1x96xf32>
    %29 = vector.shape_cast %28 : vector<1x1x96xf32> to vector<1x96xf32>
    %30 = vector.broadcast %29 : vector<1x96xf32> to vector<16x96xf32>
    %31 = arith.addf %27, %30 : vector<16x96xf32>
    %32 = vector.extract_strided_slice %31 {offsets = [0, 0], sizes = [16, 32], strides = [1, 1]} : vector<16x96xf32> to vector<16x32xf32>
    %33 = vector.extract_strided_slice %31 {offsets = [0, 32], sizes = [16, 32], strides = [1, 1]} : vector<16x96xf32> to vector<16x32xf32>
    %34 = vector.extract_strided_slice %31 {offsets = [0, 64], sizes = [16, 32], strides = [1, 1]} : vector<16x96xf32> to vector<16x32xf32>
    %c0_19 = arith.constant 0 : index
    %c0_20 = arith.constant 0 : index
    %c0_21 = arith.constant 0 : index
    %35 = vector.load %arg2[%c0_19, %c0_20, %c0_21] : memref<2x1x8xf32, #tpu.memory_space<vmem>>, vector<1x1x8xf32>
    %36 = vector.shape_cast %35 : vector<1x1x8xf32> to vector<1x8xf32>
    %37 = vector.extract_strided_slice %32 {offsets = [0, 0], sizes = [8, 16], strides = [1, 1]} : vector<16x32xf32> to vector<8x16xf32>
    %38 = vector.extract_strided_slice %33 {offsets = [0, 0], sizes = [8, 16], strides = [1, 1]} : vector<16x32xf32> to vector<8x16xf32>
    %39 = vector.extract_strided_slice %34 {offsets = [0, 0], sizes = [8, 16], strides = [1, 1]} : vector<16x32xf32> to vector<8x16xf32>
    %cst_22 = arith.constant dense<0.000000e+00> : vector<8x8xf32>
    %40 = tpu.matmul %37, %38, %cst_22 {dimension_numbers = #tpu.dot_dimension_numbers<[1], [1], [0], [0], [0, 0, 1, 0], [], []>} : vector<8x16xf32>, vector<8x16xf32>, vector<8x8xf32> -> vector<8x8xf32>
    %41 = vector.broadcast %36 : vector<1x8xf32> to vector<8x8xf32>
    %42 = arith.addf %40, %41 : vector<8x8xf32>
    %cst_23 = arith.constant dense<0xFF800000> : vector<8xf32>
    %43 = vector.multi_reduction <maximumf>, %42, %cst_23 [1] : vector<8x8xf32> to vector<8xf32>
    %44 = vector.shape_cast %43 : vector<8xf32> to vector<8x1xf32>
    %45 = vector.broadcast %44 : vector<8x1xf32> to vector<8x8xf32>
    %46 = arith.subf %42, %45 : vector<8x8xf32>
    %47 = math.exp %46 : vector<8x8xf32>
    %cst_24 = arith.constant dense<0.000000e+00> : vector<8xf32>
    %48 = vector.multi_reduction <add>, %47, %cst_24 [1] : vector<8x8xf32> to vector<8xf32>
    %49 = vector.shape_cast %48 : vector<8xf32> to vector<8x1xf32>
    %50 = tpu.reciprocal %49 {approx = true} : vector<8x1xf32> -> vector<8x1xf32>
    %51 = vector.broadcast %50 : vector<8x1xf32> to vector<8x8xf32>
    %52 = arith.mulf %47, %51 : vector<8x8xf32>
    %cst_25 = arith.constant dense<0.000000e+00> : vector<8x16xf32>
    %53 = tpu.matmul %52, %39, %cst_25 {dimension_numbers = #tpu.dot_dimension_numbers<[1], [0], [0], [1], [0, 0, 1, 1], [], []>} : vector<8x8xf32>, vector<8x16xf32>, vector<8x16xf32> -> vector<8x16xf32>
    %54 = vector.extract_strided_slice %26 {offsets = [0, 0], sizes = [16, 32], strides = [1, 1]} : vector<32x32xf32> to vector<16x32xf32>
    %cst_26 = arith.constant dense<0.000000e+00> : vector<8x32xf32>
    %55 = tpu.matmul %53, %54, %cst_26 {dimension_numbers = #tpu.dot_dimension_numbers<[1], [0], [0], [1], [0, 0, 1, 1], [], []>} : vector<8x16xf32>, vector<16x32xf32>, vector<8x32xf32> -> vector<8x32xf32>
    %56 = vector.extract_strided_slice %32 {offsets = [0, 16], sizes = [8, 16], strides = [1, 1]} : vector<16x32xf32> to vector<8x16xf32>
    %57 = vector.extract_strided_slice %33 {offsets = [0, 16], sizes = [8, 16], strides = [1, 1]} : vector<16x32xf32> to vector<8x16xf32>
    %58 = vector.extract_strided_slice %34 {offsets = [0, 16], sizes = [8, 16], strides = [1, 1]} : vector<16x32xf32> to vector<8x16xf32>
    %cst_27 = arith.constant dense<0.000000e+00> : vector<8x8xf32>
    %59 = tpu.matmul %56, %57, %cst_27 {dimension_numbers = #tpu.dot_dimension_numbers<[1], [1], [0], [0], [0, 0, 1, 0], [], []>} : vector<8x16xf32>, vector<8x16xf32>, vector<8x8xf32> -> vector<8x8xf32>
    %60 = vector.broadcast %36 : vector<1x8xf32> to vector<8x8xf32>
    %61 = arith.addf %59, %60 : vector<8x8xf32>
    %cst_28 = arith.constant dense<0xFF800000> : vector<8xf32>
    %62 = vector.multi_reduction <maximumf>, %61, %cst_28 [1] : vector<8x8xf32> to vector<8xf32>
    %63 = vector.shape_cast %62 : vector<8xf32> to vector<8x1xf32>
    %64 = vector.broadcast %63 : vector<8x1xf32> to vector<8x8xf32>
    %65 = arith.subf %61, %64 : vector<8x8xf32>
    %66 = math.exp %65 : vector<8x8xf32>
    %cst_29 = arith.constant dense<0.000000e+00> : vector<8xf32>
    %67 = vector.multi_reduction <add>, %66, %cst_29 [1] : vector<8x8xf32> to vector<8xf32>
    %68 = vector.shape_cast %67 : vector<8xf32> to vector<8x1xf32>
    %69 = tpu.reciprocal %68 {approx = true} : vector<8x1xf32> -> vector<8x1xf32>
    %70 = vector.broadcast %69 : vector<8x1xf32> to vector<8x8xf32>
    %71 = arith.mulf %66, %70 : vector<8x8xf32>
    %cst_30 = arith.constant dense<0.000000e+00> : vector<8x16xf32>
    %72 = tpu.matmul %71, %58, %cst_30 {dimension_numbers = #tpu.dot_dimension_numbers<[1], [0], [0], [1], [0, 0, 1, 1], [], []>} : vector<8x8xf32>, vector<8x16xf32>, vector<8x16xf32> -> vector<8x16xf32>
    %73 = vector.extract_strided_slice %26 {offsets = [16, 0], sizes = [16, 32], strides = [1, 1]} : vector<32x32xf32> to vector<16x32xf32>
    %cst_31 = arith.constant dense<0.000000e+00> : vector<8x32xf32>
    %74 = tpu.matmul %72, %73, %cst_31 {dimension_numbers = #tpu.dot_dimension_numbers<[1], [0], [0], [1], [0, 0, 1, 1], [], []>} : vector<8x16xf32>, vector<16x32xf32>, vector<8x32xf32> -> vector<8x32xf32>
    %75 = arith.addf %55, %74 : vector<8x32xf32>
    %c1 = arith.constant 1 : index
    %c0_32 = arith.constant 0 : index
    %c0_33 = arith.constant 0 : index
    %76 = vector.load %arg2[%c1, %c0_32, %c0_33] : memref<2x1x8xf32, #tpu.memory_space<vmem>>, vector<1x1x8xf32>
    %77 = vector.shape_cast %76 : vector<1x1x8xf32> to vector<1x8xf32>
    %78 = vector.extract_strided_slice %32 {offsets = [8, 0], sizes = [8, 16], strides = [1, 1]} : vector<16x32xf32> to vector<8x16xf32>
    %79 = vector.extract_strided_slice %33 {offsets = [8, 0], sizes = [8, 16], strides = [1, 1]} : vector<16x32xf32> to vector<8x16xf32>
    %80 = vector.extract_strided_slice %34 {offsets = [8, 0], sizes = [8, 16], strides = [1, 1]} : vector<16x32xf32> to vector<8x16xf32>
    %cst_34 = arith.constant dense<0.000000e+00> : vector<8x8xf32>
    %81 = tpu.matmul %78, %79, %cst_34 {dimension_numbers = #tpu.dot_dimension_numbers<[1], [1], [0], [0], [0, 0, 1, 0], [], []>} : vector<8x16xf32>, vector<8x16xf32>, vector<8x8xf32> -> vector<8x8xf32>
    %82 = vector.broadcast %77 : vector<1x8xf32> to vector<8x8xf32>
    %83 = arith.addf %81, %82 : vector<8x8xf32>
    %cst_35 = arith.constant dense<0xFF800000> : vector<8xf32>
    %84 = vector.multi_reduction <maximumf>, %83, %cst_35 [1] : vector<8x8xf32> to vector<8xf32>
    %85 = vector.shape_cast %84 : vector<8xf32> to vector<8x1xf32>
    %86 = vector.broadcast %85 : vector<8x1xf32> to vector<8x8xf32>
    %87 = arith.subf %83, %86 : vector<8x8xf32>
    %88 = math.exp %87 : vector<8x8xf32>
    %cst_36 = arith.constant dense<0.000000e+00> : vector<8xf32>
    %89 = vector.multi_reduction <add>, %88, %cst_36 [1] : vector<8x8xf32> to vector<8xf32>
    %90 = vector.shape_cast %89 : vector<8xf32> to vector<8x1xf32>
    %91 = tpu.reciprocal %90 {approx = true} : vector<8x1xf32> -> vector<8x1xf32>
    %92 = vector.broadcast %91 : vector<8x1xf32> to vector<8x8xf32>
    %93 = arith.mulf %88, %92 : vector<8x8xf32>
    %cst_37 = arith.constant dense<0.000000e+00> : vector<8x16xf32>
    %94 = tpu.matmul %93, %80, %cst_37 {dimension_numbers = #tpu.dot_dimension_numbers<[1], [0], [0], [1], [0, 0, 1, 1], [], []>} : vector<8x8xf32>, vector<8x16xf32>, vector<8x16xf32> -> vector<8x16xf32>
    %95 = vector.extract_strided_slice %26 {offsets = [0, 0], sizes = [16, 32], strides = [1, 1]} : vector<32x32xf32> to vector<16x32xf32>
    %cst_38 = arith.constant dense<0.000000e+00> : vector<8x32xf32>
    %96 = tpu.matmul %94, %95, %cst_38 {dimension_numbers = #tpu.dot_dimension_numbers<[1], [0], [0], [1], [0, 0, 1, 1], [], []>} : vector<8x16xf32>, vector<16x32xf32>, vector<8x32xf32> -> vector<8x32xf32>
    %97 = vector.extract_strided_slice %32 {offsets = [8, 16], sizes = [8, 16], strides = [1, 1]} : vector<16x32xf32> to vector<8x16xf32>
    %98 = vector.extract_strided_slice %33 {offsets = [8, 16], sizes = [8, 16], strides = [1, 1]} : vector<16x32xf32> to vector<8x16xf32>
    %99 = vector.extract_strided_slice %34 {offsets = [8, 16], sizes = [8, 16], strides = [1, 1]} : vector<16x32xf32> to vector<8x16xf32>
    %cst_39 = arith.constant dense<0.000000e+00> : vector<8x8xf32>
    %100 = tpu.matmul %97, %98, %cst_39 {dimension_numbers = #tpu.dot_dimension_numbers<[1], [1], [0], [0], [0, 0, 1, 0], [], []>} : vector<8x16xf32>, vector<8x16xf32>, vector<8x8xf32> -> vector<8x8xf32>
    %101 = vector.broadcast %77 : vector<1x8xf32> to vector<8x8xf32>
    %102 = arith.addf %100, %101 : vector<8x8xf32>
    %cst_40 = arith.constant dense<0xFF800000> : vector<8xf32>
    %103 = vector.multi_reduction <maximumf>, %102, %cst_40 [1] : vector<8x8xf32> to vector<8xf32>
    %104 = vector.shape_cast %103 : vector<8xf32> to vector<8x1xf32>
    %105 = vector.broadcast %104 : vector<8x1xf32> to vector<8x8xf32>
    %106 = arith.subf %102, %105 : vector<8x8xf32>
    %107 = math.exp %106 : vector<8x8xf32>
    %cst_41 = arith.constant dense<0.000000e+00> : vector<8xf32>
    %108 = vector.multi_reduction <add>, %107, %cst_41 [1] : vector<8x8xf32> to vector<8xf32>
    %109 = vector.shape_cast %108 : vector<8xf32> to vector<8x1xf32>
    %110 = tpu.reciprocal %109 {approx = true} : vector<8x1xf32> -> vector<8x1xf32>
    %111 = vector.broadcast %110 : vector<8x1xf32> to vector<8x8xf32>
    %112 = arith.mulf %107, %111 : vector<8x8xf32>
    %cst_42 = arith.constant dense<0.000000e+00> : vector<8x16xf32>
    %113 = tpu.matmul %112, %99, %cst_42 {dimension_numbers = #tpu.dot_dimension_numbers<[1], [0], [0], [1], [0, 0, 1, 1], [], []>} : vector<8x8xf32>, vector<8x16xf32>, vector<8x16xf32> -> vector<8x16xf32>
    %114 = vector.extract_strided_slice %26 {offsets = [16, 0], sizes = [16, 32], strides = [1, 1]} : vector<32x32xf32> to vector<16x32xf32>
    %cst_43 = arith.constant dense<0.000000e+00> : vector<8x32xf32>
    %115 = tpu.matmul %113, %114, %cst_43 {dimension_numbers = #tpu.dot_dimension_numbers<[1], [0], [0], [1], [0, 0, 1, 1], [], []>} : vector<8x16xf32>, vector<16x32xf32>, vector<8x32xf32> -> vector<8x32xf32>
    %116 = arith.addf %96, %115 : vector<8x32xf32>
    %117 = tpu.concatenate %75, %116 in 0 : vector<8x32xf32>, vector<8x32xf32> -> vector<16x32xf32>
    %c0_44 = arith.constant 0 : index
    %c0_45 = arith.constant 0 : index
    %c0_46 = arith.constant 0 : index
    %118 = vector.load %arg8[%c0_44, %c0_45, %c0_46] : memref<2x1x32xf32, #tpu.memory_space<vmem>>, vector<1x1x32xf32>
    %119 = vector.shape_cast %118 : vector<1x1x32xf32> to vector<1x32xf32>
    %120 = vector.broadcast %119 : vector<1x32xf32> to vector<16x32xf32>
    %121 = arith.addf %117, %120 : vector<16x32xf32>
    %122 = arith.addf %121, %22 : vector<16x32xf32>
    %c0_47 = arith.constant 0 : index
    %c0_48 = arith.constant 0 : index
    %c0_49 = arith.constant 0 : index
    %123 = vector.load %arg9[%c0_47, %c0_48, %c0_49] : memref<2x1x32xf32, #tpu.memory_space<vmem>>, vector<1x1x32xf32>
    %124 = vector.shape_cast %123 : vector<1x1x32xf32> to vector<1x32xf32>
    %c0_50 = arith.constant 0 : index
    %c0_51 = arith.constant 0 : index
    %c0_52 = arith.constant 0 : index
    %125 = vector.load %arg10[%c0_50, %c0_51, %c0_52] : memref<2x1x32xf32, #tpu.memory_space<vmem>>, vector<1x1x32xf32>
    %126 = vector.shape_cast %125 : vector<1x1x32xf32> to vector<1x32xf32>
    %cst_53 = arith.constant dense<0.000000e+00> : vector<16xf32>
    %127 = vector.multi_reduction <add>, %122, %cst_53 [1] : vector<16x32xf32> to vector<16xf32>
    %128 = vector.shape_cast %127 : vector<16xf32> to vector<16x1xf32>
    %cst_54 = arith.constant 3.200000e+01 : f32
    %129 = vector.broadcast %cst_54 : f32 to vector<16x1xf32>
    %130 = arith.divf %128, %129 : vector<16x1xf32>
    %131 = vector.broadcast %130 : vector<16x1xf32> to vector<16x32xf32>
    %132 = arith.subf %122, %131 : vector<16x32xf32>
    %133 = arith.mulf %132, %132 : vector<16x32xf32>
    %cst_55 = arith.constant dense<0.000000e+00> : vector<16xf32>
    %134 = vector.multi_reduction <add>, %133, %cst_55 [1] : vector<16x32xf32> to vector<16xf32>
    %135 = vector.shape_cast %134 : vector<16xf32> to vector<16x1xf32>
    %cst_56 = arith.constant 3.200000e+01 : f32
    %136 = vector.broadcast %cst_56 : f32 to vector<16x1xf32>
    %137 = arith.divf %135, %136 : vector<16x1xf32>
    %cst_57 = arith.constant 9.99999996E-13 : f32
    %138 = vector.broadcast %cst_57 : f32 to vector<16x1xf32>
    %139 = arith.addf %137, %138 : vector<16x1xf32>
    %140 = math.rsqrt %139 : vector<16x1xf32>
    %141 = vector.broadcast %140 : vector<16x1xf32> to vector<16x32xf32>
    %142 = arith.mulf %132, %141 : vector<16x32xf32>
    %143 = vector.broadcast %124 : vector<1x32xf32> to vector<16x32xf32>
    %144 = arith.mulf %142, %143 : vector<16x32xf32>
    %145 = vector.broadcast %126 : vector<1x32xf32> to vector<16x32xf32>
    %146 = arith.addf %144, %145 : vector<16x32xf32>
    %c0_58 = arith.constant 0 : index
    %c0_59 = arith.constant 0 : index
    %c0_60 = arith.constant 0 : index
    %147 = vector.load %arg11[%c0_58, %c0_59, %c0_60] : memref<2x32x64xf32, #tpu.memory_space<vmem>>, vector<1x32x64xf32>
    %148 = vector.shape_cast %147 : vector<1x32x64xf32> to vector<32x64xf32>
    %cst_61 = arith.constant dense<0.000000e+00> : vector<16x64xf32>
    %149 = tpu.matmul %146, %148, %cst_61 {dimension_numbers = #tpu.dot_dimension_numbers<[1], [0], [0], [1], [0, 0, 1, 1], [], []>} : vector<16x32xf32>, vector<32x64xf32>, vector<16x64xf32> -> vector<16x64xf32>
    %c0_62 = arith.constant 0 : index
    %c0_63 = arith.constant 0 : index
    %c0_64 = arith.constant 0 : index
    %150 = vector.load %arg12[%c0_62, %c0_63, %c0_64] : memref<2x1x64xf32, #tpu.memory_space<vmem>>, vector<1x1x64xf32>
    %151 = vector.shape_cast %150 : vector<1x1x64xf32> to vector<1x64xf32>
    %152 = vector.broadcast %151 : vector<1x64xf32> to vector<16x64xf32>
    %153 = arith.addf %149, %152 : vector<16x64xf32>
    %cst_65 = arith.constant 5.000000e-01 : f32
    %154 = vector.broadcast %cst_65 : f32 to vector<16x64xf32>
    %155 = arith.mulf %154, %153 : vector<16x64xf32>
    %cst_66 = arith.constant 0.707106769 : f32
    %156 = vector.broadcast %cst_66 : f32 to vector<16x64xf32>
    %157 = arith.mulf %153, %156 : vector<16x64xf32>
    %cst_67 = arith.constant 0.000000e+00 : f32
    %158 = vector.broadcast %cst_67 : f32 to vector<16x64xf32>
    %159 = arith.cmpf oge, %157, %158 : vector<16x64xf32>
    %cst_68 = arith.constant 1.000000e+00 : f32
    %cst_69 = arith.constant -1.000000e+00 : f32
    %160 = vector.broadcast %cst_68 : f32 to vector<16x64xf32>
    %161 = vector.broadcast %cst_69 : f32 to vector<16x64xf32>
    %162 = arith.select %159, %160, %161 : vector<16x64xi1>, vector<16x64xf32>
    %163 = math.absf %157 : vector<16x64xf32>
    %cst_70 = arith.constant 0.327591091 : f32
    %164 = vector.broadcast %cst_70 : f32 to vector<16x64xf32>
    %165 = arith.mulf %164, %163 : vector<16x64xf32>
    %cst_71 = arith.constant 1.000000e+00 : f32
    %166 = vector.broadcast %cst_71 : f32 to vector<16x64xf32>
    %167 = arith.addf %166, %165 : vector<16x64xf32>
    %cst_72 = arith.constant 1.000000e+00 : f32
    %168 = vector.broadcast %cst_72 : f32 to vector<16x64xf32>
    %169 = arith.divf %168, %167 : vector<16x64xf32>
    %cst_73 = arith.constant 1.06140542 : f32
    %170 = vector.broadcast %cst_73 : f32 to vector<16x64xf32>
    %171 = arith.mulf %170, %169 : vector<16x64xf32>
    %cst_74 = arith.constant -1.45315206 : f32
    %172 = vector.broadcast %cst_74 : f32 to vector<16x64xf32>
    %173 = arith.addf %171, %172 : vector<16x64xf32>
    %174 = arith.mulf %173, %169 : vector<16x64xf32>
    %cst_75 = arith.constant 1.42141378 : f32
    %175 = vector.broadcast %cst_75 : f32 to vector<16x64xf32>
    %176 = arith.addf %174, %175 : vector<16x64xf32>
    %177 = arith.mulf %176, %169 : vector<16x64xf32>
    %cst_76 = arith.constant -0.284496725 : f32
    %178 = vector.broadcast %cst_76 : f32 to vector<16x64xf32>
    %179 = arith.addf %177, %178 : vector<16x64xf32>
    %180 = arith.mulf %179, %169 : vector<16x64xf32>
    %cst_77 = arith.constant 0.254829586 : f32
    %181 = vector.broadcast %cst_77 : f32 to vector<16x64xf32>
    %182 = arith.addf %180, %181 : vector<16x64xf32>
    %183 = arith.mulf %182, %169 : vector<16x64xf32>
    %cst_78 = arith.constant 0.000000e+00 : f32
    %184 = vector.broadcast %cst_78 : f32 to vector<16x64xf32>
    %185 = arith.subf %184, %163 : vector<16x64xf32>
    %186 = arith.mulf %185, %163 : vector<16x64xf32>
    %187 = math.exp %186 : vector<16x64xf32>
    %188 = arith.mulf %183, %187 : vector<16x64xf32>
    %cst_79 = arith.constant 1.000000e+00 : f32
    %189 = vector.broadcast %cst_79 : f32 to vector<16x64xf32>
    %190 = arith.subf %189, %188 : vector<16x64xf32>
    %191 = arith.mulf %162, %190 : vector<16x64xf32>
    %cst_80 = arith.constant 1.000000e+00 : f32
    %192 = vector.broadcast %cst_80 : f32 to vector<16x64xf32>
    %193 = arith.addf %192, %191 : vector<16x64xf32>
    %194 = arith.mulf %155, %193 : vector<16x64xf32>
    %c0_81 = arith.constant 0 : index
    %c0_82 = arith.constant 0 : index
    %c0_83 = arith.constant 0 : index
    %195 = vector.load %arg13[%c0_81, %c0_82, %c0_83] : memref<2x64x32xf32, #tpu.memory_space<vmem>>, vector<1x64x32xf32>
    %196 = vector.shape_cast %195 : vector<1x64x32xf32> to vector<64x32xf32>
    %cst_84 = arith.constant dense<0.000000e+00> : vector<16x32xf32>
    %197 = tpu.matmul %194, %196, %cst_84 {dimension_numbers = #tpu.dot_dimension_numbers<[1], [0], [0], [1], [0, 0, 1, 1], [], []>} : vector<16x64xf32>, vector<64x32xf32>, vector<16x32xf32> -> vector<16x32xf32>
    %c0_85 = arith.constant 0 : index
    %c0_86 = arith.constant 0 : index
    %c0_87 = arith.constant 0 : index
    %198 = vector.load %arg14[%c0_85, %c0_86, %c0_87] : memref<2x1x32xf32, #tpu.memory_space<vmem>>, vector<1x1x32xf32>
    %199 = vector.shape_cast %198 : vector<1x1x32xf32> to vector<1x32xf32>
    %200 = vector.broadcast %199 : vector<1x32xf32> to vector<16x32xf32>
    %201 = arith.addf %197, %200 : vector<16x32xf32>
    %202 = arith.addf %201, %146 : vector<16x32xf32>
    %c0_88 = arith.constant 0 : index
    %c0_89 = arith.constant 0 : index
    %c0_90 = arith.constant 0 : index
    %203 = vector.load %arg15[%c0_88, %c0_89, %c0_90] : memref<2x1x32xf32, #tpu.memory_space<vmem>>, vector<1x1x32xf32>
    %204 = vector.shape_cast %203 : vector<1x1x32xf32> to vector<1x32xf32>
    %c0_91 = arith.constant 0 : index
    %c0_92 = arith.constant 0 : index
    %c0_93 = arith.constant 0 : index
    %205 = vector.load %arg16[%c0_91, %c0_92, %c0_93] : memref<2x1x32xf32, #tpu.memory_space<vmem>>, vector<1x1x32xf32>
    %206 = vector.shape_cast %205 : vector<1x1x32xf32> to vector<1x32xf32>
    %cst_94 = arith.constant dense<0.000000e+00> : vector<16xf32>
    %207 = vector.multi_reduction <add>, %202, %cst_94 [1] : vector<16x32xf32> to vector<16xf32>
    %208 = vector.shape_cast %207 : vector<16xf32> to vector<16x1xf32>
    %cst_95 = arith.constant 3.200000e+01 : f32
    %209 = vector.broadcast %cst_95 : f32 to vector<16x1xf32>
    %210 = arith.divf %208, %209 : vector<16x1xf32>
    %211 = vector.broadcast %210 : vector<16x1xf32> to vector<16x32xf32>
    %212 = arith.subf %202, %211 : vector<16x32xf32>
    %213 = arith.mulf %212, %212 : vector<16x32xf32>
    %cst_96 = arith.constant dense<0.000000e+00> : vector<16xf32>
    %214 = vector.multi_reduction <add>, %213, %cst_96 [1] : vector<16x32xf32> to vector<16xf32>
    %215 = vector.shape_cast %214 : vector<16xf32> to vector<16x1xf32>
    %cst_97 = arith.constant 3.200000e+01 : f32
    %216 = vector.broadcast %cst_97 : f32 to vector<16x1xf32>
    %217 = arith.divf %215, %216 : vector<16x1xf32>
    %cst_98 = arith.constant 9.99999996E-13 : f32
    %218 = vector.broadcast %cst_98 : f32 to vector<16x1xf32>
    %219 = arith.addf %217, %218 : vector<16x1xf32>
    %220 = math.rsqrt %219 : vector<16x1xf32>
    %221 = vector.broadcast %220 : vector<16x1xf32> to vector<16x32xf32>
    %222 = arith.mulf %212, %221 : vector<16x32xf32>
    %223 = vector.broadcast %204 : vector<1x32xf32> to vector<16x32xf32>
    %224 = arith.mulf %222, %223 : vector<16x32xf32>
    %225 = vector.broadcast %206 : vector<1x32xf32> to vector<16x32xf32>
    %226 = arith.addf %224, %225 : vector<16x32xf32>
    %c1_99 = arith.constant 1 : index
    %c0_100 = arith.constant 0 : index
    %c0_101 = arith.constant 0 : index
    %227 = vector.load %arg5[%c1_99, %c0_100, %c0_101] : memref<2x32x96xf32, #tpu.memory_space<vmem>>, vector<1x32x96xf32>
    %228 = vector.shape_cast %227 : vector<1x32x96xf32> to vector<32x96xf32>
    %c1_102 = arith.constant 1 : index
    %c0_103 = arith.constant 0 : index
    %c0_104 = arith.constant 0 : index
    %229 = vector.load %arg7[%c1_102, %c0_103, %c0_104] : memref<2x32x32xf32, #tpu.memory_space<vmem>>, vector<1x32x32xf32>
    %230 = vector.shape_cast %229 : vector<1x32x32xf32> to vector<32x32xf32>
    %cst_105 = arith.constant dense<0.000000e+00> : vector<16x96xf32>
    %231 = tpu.matmul %226, %228, %cst_105 {dimension_numbers = #tpu.dot_dimension_numbers<[1], [0], [0], [1], [0, 0, 1, 1], [], []>} : vector<16x32xf32>, vector<32x96xf32>, vector<16x96xf32> -> vector<16x96xf32>
    %c1_106 = arith.constant 1 : index
    %c0_107 = arith.constant 0 : index
    %c0_108 = arith.constant 0 : index
    %232 = vector.load %arg6[%c1_106, %c0_107, %c0_108] : memref<2x1x96xf32, #tpu.memory_space<vmem>>, vector<1x1x96xf32>
    %233 = vector.shape_cast %232 : vector<1x1x96xf32> to vector<1x96xf32>
    %234 = vector.broadcast %233 : vector<1x96xf32> to vector<16x96xf32>
    %235 = arith.addf %231, %234 : vector<16x96xf32>
    %236 = vector.extract_strided_slice %235 {offsets = [0, 0], sizes = [16, 32], strides = [1, 1]} : vector<16x96xf32> to vector<16x32xf32>
    %237 = vector.extract_strided_slice %235 {offsets = [0, 32], sizes = [16, 32], strides = [1, 1]} : vector<16x96xf32> to vector<16x32xf32>
    %238 = vector.extract_strided_slice %235 {offsets = [0, 64], sizes = [16, 32], strides = [1, 1]} : vector<16x96xf32> to vector<16x32xf32>
    %c0_109 = arith.constant 0 : index
    %c0_110 = arith.constant 0 : index
    %c0_111 = arith.constant 0 : index
    %239 = vector.load %arg2[%c0_109, %c0_110, %c0_111] : memref<2x1x8xf32, #tpu.memory_space<vmem>>, vector<1x1x8xf32>
    %240 = vector.shape_cast %239 : vector<1x1x8xf32> to vector<1x8xf32>
    %241 = vector.extract_strided_slice %236 {offsets = [0, 0], sizes = [8, 16], strides = [1, 1]} : vector<16x32xf32> to vector<8x16xf32>
    %242 = vector.extract_strided_slice %237 {offsets = [0, 0], sizes = [8, 16], strides = [1, 1]} : vector<16x32xf32> to vector<8x16xf32>
    %243 = vector.extract_strided_slice %238 {offsets = [0, 0], sizes = [8, 16], strides = [1, 1]} : vector<16x32xf32> to vector<8x16xf32>
    %cst_112 = arith.constant dense<0.000000e+00> : vector<8x8xf32>
    %244 = tpu.matmul %241, %242, %cst_112 {dimension_numbers = #tpu.dot_dimension_numbers<[1], [1], [0], [0], [0, 0, 1, 0], [], []>} : vector<8x16xf32>, vector<8x16xf32>, vector<8x8xf32> -> vector<8x8xf32>
    %245 = vector.broadcast %240 : vector<1x8xf32> to vector<8x8xf32>
    %246 = arith.addf %244, %245 : vector<8x8xf32>
    %cst_113 = arith.constant dense<0xFF800000> : vector<8xf32>
    %247 = vector.multi_reduction <maximumf>, %246, %cst_113 [1] : vector<8x8xf32> to vector<8xf32>
    %248 = vector.shape_cast %247 : vector<8xf32> to vector<8x1xf32>
    %249 = vector.broadcast %248 : vector<8x1xf32> to vector<8x8xf32>
    %250 = arith.subf %246, %249 : vector<8x8xf32>
    %251 = math.exp %250 : vector<8x8xf32>
    %cst_114 = arith.constant dense<0.000000e+00> : vector<8xf32>
    %252 = vector.multi_reduction <add>, %251, %cst_114 [1] : vector<8x8xf32> to vector<8xf32>
    %253 = vector.shape_cast %252 : vector<8xf32> to vector<8x1xf32>
    %254 = tpu.reciprocal %253 {approx = true} : vector<8x1xf32> -> vector<8x1xf32>
    %255 = vector.broadcast %254 : vector<8x1xf32> to vector<8x8xf32>
    %256 = arith.mulf %251, %255 : vector<8x8xf32>
    %cst_115 = arith.constant dense<0.000000e+00> : vector<8x16xf32>
    %257 = tpu.matmul %256, %243, %cst_115 {dimension_numbers = #tpu.dot_dimension_numbers<[1], [0], [0], [1], [0, 0, 1, 1], [], []>} : vector<8x8xf32>, vector<8x16xf32>, vector<8x16xf32> -> vector<8x16xf32>
    %258 = vector.extract_strided_slice %230 {offsets = [0, 0], sizes = [16, 32], strides = [1, 1]} : vector<32x32xf32> to vector<16x32xf32>
    %cst_116 = arith.constant dense<0.000000e+00> : vector<8x32xf32>
    %259 = tpu.matmul %257, %258, %cst_116 {dimension_numbers = #tpu.dot_dimension_numbers<[1], [0], [0], [1], [0, 0, 1, 1], [], []>} : vector<8x16xf32>, vector<16x32xf32>, vector<8x32xf32> -> vector<8x32xf32>
    %260 = vector.extract_strided_slice %236 {offsets = [0, 16], sizes = [8, 16], strides = [1, 1]} : vector<16x32xf32> to vector<8x16xf32>
    %261 = vector.extract_strided_slice %237 {offsets = [0, 16], sizes = [8, 16], strides = [1, 1]} : vector<16x32xf32> to vector<8x16xf32>
    %262 = vector.extract_strided_slice %238 {offsets = [0, 16], sizes = [8, 16], strides = [1, 1]} : vector<16x32xf32> to vector<8x16xf32>
    %cst_117 = arith.constant dense<0.000000e+00> : vector<8x8xf32>
    %263 = tpu.matmul %260, %261, %cst_117 {dimension_numbers = #tpu.dot_dimension_numbers<[1], [1], [0], [0], [0, 0, 1, 0], [], []>} : vector<8x16xf32>, vector<8x16xf32>, vector<8x8xf32> -> vector<8x8xf32>
    %264 = vector.broadcast %240 : vector<1x8xf32> to vector<8x8xf32>
    %265 = arith.addf %263, %264 : vector<8x8xf32>
    %cst_118 = arith.constant dense<0xFF800000> : vector<8xf32>
    %266 = vector.multi_reduction <maximumf>, %265, %cst_118 [1] : vector<8x8xf32> to vector<8xf32>
    %267 = vector.shape_cast %266 : vector<8xf32> to vector<8x1xf32>
    %268 = vector.broadcast %267 : vector<8x1xf32> to vector<8x8xf32>
    %269 = arith.subf %265, %268 : vector<8x8xf32>
    %270 = math.exp %269 : vector<8x8xf32>
    %cst_119 = arith.constant dense<0.000000e+00> : vector<8xf32>
    %271 = vector.multi_reduction <add>, %270, %cst_119 [1] : vector<8x8xf32> to vector<8xf32>
    %272 = vector.shape_cast %271 : vector<8xf32> to vector<8x1xf32>
    %273 = tpu.reciprocal %272 {approx = true} : vector<8x1xf32> -> vector<8x1xf32>
    %274 = vector.broadcast %273 : vector<8x1xf32> to vector<8x8xf32>
    %275 = arith.mulf %270, %274 : vector<8x8xf32>
    %cst_120 = arith.constant dense<0.000000e+00> : vector<8x16xf32>
    %276 = tpu.matmul %275, %262, %cst_120 {dimension_numbers = #tpu.dot_dimension_numbers<[1], [0], [0], [1], [0, 0, 1, 1], [], []>} : vector<8x8xf32>, vector<8x16xf32>, vector<8x16xf32> -> vector<8x16xf32>
    %277 = vector.extract_strided_slice %230 {offsets = [16, 0], sizes = [16, 32], strides = [1, 1]} : vector<32x32xf32> to vector<16x32xf32>
    %cst_121 = arith.constant dense<0.000000e+00> : vector<8x32xf32>
    %278 = tpu.matmul %276, %277, %cst_121 {dimension_numbers = #tpu.dot_dimension_numbers<[1], [0], [0], [1], [0, 0, 1, 1], [], []>} : vector<8x16xf32>, vector<16x32xf32>, vector<8x32xf32> -> vector<8x32xf32>
    %279 = arith.addf %259, %278 : vector<8x32xf32>
    %c1_122 = arith.constant 1 : index
    %c0_123 = arith.constant 0 : index
    %c0_124 = arith.constant 0 : index
    %280 = vector.load %arg2[%c1_122, %c0_123, %c0_124] : memref<2x1x8xf32, #tpu.memory_space<vmem>>, vector<1x1x8xf32>
    %281 = vector.shape_cast %280 : vector<1x1x8xf32> to vector<1x8xf32>
    %282 = vector.extract_strided_slice %236 {offsets = [8, 0], sizes = [8, 16], strides = [1, 1]} : vector<16x32xf32> to vector<8x16xf32>
    %283 = vector.extract_strided_slice %237 {offsets = [8, 0], sizes = [8, 16], strides = [1, 1]} : vector<16x32xf32> to vector<8x16xf32>
    %284 = vector.extract_strided_slice %238 {offsets = [8, 0], sizes = [8, 16], strides = [1, 1]} : vector<16x32xf32> to vector<8x16xf32>
    %cst_125 = arith.constant dense<0.000000e+00> : vector<8x8xf32>
    %285 = tpu.matmul %282, %283, %cst_125 {dimension_numbers = #tpu.dot_dimension_numbers<[1], [1], [0], [0], [0, 0, 1, 0], [], []>} : vector<8x16xf32>, vector<8x16xf32>, vector<8x8xf32> -> vector<8x8xf32>
    %286 = vector.broadcast %281 : vector<1x8xf32> to vector<8x8xf32>
    %287 = arith.addf %285, %286 : vector<8x8xf32>
    %cst_126 = arith.constant dense<0xFF800000> : vector<8xf32>
    %288 = vector.multi_reduction <maximumf>, %287, %cst_126 [1] : vector<8x8xf32> to vector<8xf32>
    %289 = vector.shape_cast %288 : vector<8xf32> to vector<8x1xf32>
    %290 = vector.broadcast %289 : vector<8x1xf32> to vector<8x8xf32>
    %291 = arith.subf %287, %290 : vector<8x8xf32>
    %292 = math.exp %291 : vector<8x8xf32>
    %cst_127 = arith.constant dense<0.000000e+00> : vector<8xf32>
    %293 = vector.multi_reduction <add>, %292, %cst_127 [1] : vector<8x8xf32> to vector<8xf32>
    %294 = vector.shape_cast %293 : vector<8xf32> to vector<8x1xf32>
    %295 = tpu.reciprocal %294 {approx = true} : vector<8x1xf32> -> vector<8x1xf32>
    %296 = vector.broadcast %295 : vector<8x1xf32> to vector<8x8xf32>
    %297 = arith.mulf %292, %296 : vector<8x8xf32>
    %cst_128 = arith.constant dense<0.000000e+00> : vector<8x16xf32>
    %298 = tpu.matmul %297, %284, %cst_128 {dimension_numbers = #tpu.dot_dimension_numbers<[1], [0], [0], [1], [0, 0, 1, 1], [], []>} : vector<8x8xf32>, vector<8x16xf32>, vector<8x16xf32> -> vector<8x16xf32>
    %299 = vector.extract_strided_slice %230 {offsets = [0, 0], sizes = [16, 32], strides = [1, 1]} : vector<32x32xf32> to vector<16x32xf32>
    %cst_129 = arith.constant dense<0.000000e+00> : vector<8x32xf32>
    %300 = tpu.matmul %298, %299, %cst_129 {dimension_numbers = #tpu.dot_dimension_numbers<[1], [0], [0], [1], [0, 0, 1, 1], [], []>} : vector<8x16xf32>, vector<16x32xf32>, vector<8x32xf32> -> vector<8x32xf32>
    %301 = vector.extract_strided_slice %236 {offsets = [8, 16], sizes = [8, 16], strides = [1, 1]} : vector<16x32xf32> to vector<8x16xf32>
    %302 = vector.extract_strided_slice %237 {offsets = [8, 16], sizes = [8, 16], strides = [1, 1]} : vector<16x32xf32> to vector<8x16xf32>
    %303 = vector.extract_strided_slice %238 {offsets = [8, 16], sizes = [8, 16], strides = [1, 1]} : vector<16x32xf32> to vector<8x16xf32>
    %cst_130 = arith.constant dense<0.000000e+00> : vector<8x8xf32>
    %304 = tpu.matmul %301, %302, %cst_130 {dimension_numbers = #tpu.dot_dimension_numbers<[1], [1], [0], [0], [0, 0, 1, 0], [], []>} : vector<8x16xf32>, vector<8x16xf32>, vector<8x8xf32> -> vector<8x8xf32>
    %305 = vector.broadcast %281 : vector<1x8xf32> to vector<8x8xf32>
    %306 = arith.addf %304, %305 : vector<8x8xf32>
    %cst_131 = arith.constant dense<0xFF800000> : vector<8xf32>
    %307 = vector.multi_reduction <maximumf>, %306, %cst_131 [1] : vector<8x8xf32> to vector<8xf32>
    %308 = vector.shape_cast %307 : vector<8xf32> to vector<8x1xf32>
    %309 = vector.broadcast %308 : vector<8x1xf32> to vector<8x8xf32>
    %310 = arith.subf %306, %309 : vector<8x8xf32>
    %311 = math.exp %310 : vector<8x8xf32>
    %cst_132 = arith.constant dense<0.000000e+00> : vector<8xf32>
    %312 = vector.multi_reduction <add>, %311, %cst_132 [1] : vector<8x8xf32> to vector<8xf32>
    %313 = vector.shape_cast %312 : vector<8xf32> to vector<8x1xf32>
    %314 = tpu.reciprocal %313 {approx = true} : vector<8x1xf32> -> vector<8x1xf32>
    %315 = vector.broadcast %314 : vector<8x1xf32> to vector<8x8xf32>
    %316 = arith.mulf %311, %315 : vector<8x8xf32>
    %cst_133 = arith.constant dense<0.000000e+00> : vector<8x16xf32>
    %317 = tpu.matmul %316, %303, %cst_133 {dimension_numbers = #tpu.dot_dimension_numbers<[1], [0], [0], [1], [0, 0, 1, 1], [], []>} : vector<8x8xf32>, vector<8x16xf32>, vector<8x16xf32> -> vector<8x16xf32>
    %318 = vector.extract_strided_slice %230 {offsets = [16, 0], sizes = [16, 32], strides = [1, 1]} : vector<32x32xf32> to vector<16x32xf32>
    %cst_134 = arith.constant dense<0.000000e+00> : vector<8x32xf32>
    %319 = tpu.matmul %317, %318, %cst_134 {dimension_numbers = #tpu.dot_dimension_numbers<[1], [0], [0], [1], [0, 0, 1, 1], [], []>} : vector<8x16xf32>, vector<16x32xf32>, vector<8x32xf32> -> vector<8x32xf32>
    %320 = arith.addf %300, %319 : vector<8x32xf32>
    %321 = tpu.concatenate %279, %320 in 0 : vector<8x32xf32>, vector<8x32xf32> -> vector<16x32xf32>
    %c1_135 = arith.constant 1 : index
    %c0_136 = arith.constant 0 : index
    %c0_137 = arith.constant 0 : index
    %322 = vector.load %arg8[%c1_135, %c0_136, %c0_137] : memref<2x1x32xf32, #tpu.memory_space<vmem>>, vector<1x1x32xf32>
    %323 = vector.shape_cast %322 : vector<1x1x32xf32> to vector<1x32xf32>
    %324 = vector.broadcast %323 : vector<1x32xf32> to vector<16x32xf32>
    %325 = arith.addf %321, %324 : vector<16x32xf32>
    %326 = arith.addf %325, %226 : vector<16x32xf32>
    %c1_138 = arith.constant 1 : index
    %c0_139 = arith.constant 0 : index
    %c0_140 = arith.constant 0 : index
    %327 = vector.load %arg9[%c1_138, %c0_139, %c0_140] : memref<2x1x32xf32, #tpu.memory_space<vmem>>, vector<1x1x32xf32>
    %328 = vector.shape_cast %327 : vector<1x1x32xf32> to vector<1x32xf32>
    %c1_141 = arith.constant 1 : index
    %c0_142 = arith.constant 0 : index
    %c0_143 = arith.constant 0 : index
    %329 = vector.load %arg10[%c1_141, %c0_142, %c0_143] : memref<2x1x32xf32, #tpu.memory_space<vmem>>, vector<1x1x32xf32>
    %330 = vector.shape_cast %329 : vector<1x1x32xf32> to vector<1x32xf32>
    %cst_144 = arith.constant dense<0.000000e+00> : vector<16xf32>
    %331 = vector.multi_reduction <add>, %326, %cst_144 [1] : vector<16x32xf32> to vector<16xf32>
    %332 = vector.shape_cast %331 : vector<16xf32> to vector<16x1xf32>
    %cst_145 = arith.constant 3.200000e+01 : f32
    %333 = vector.broadcast %cst_145 : f32 to vector<16x1xf32>
    %334 = arith.divf %332, %333 : vector<16x1xf32>
    %335 = vector.broadcast %334 : vector<16x1xf32> to vector<16x32xf32>
    %336 = arith.subf %326, %335 : vector<16x32xf32>
    %337 = arith.mulf %336, %336 : vector<16x32xf32>
    %cst_146 = arith.constant dense<0.000000e+00> : vector<16xf32>
    %338 = vector.multi_reduction <add>, %337, %cst_146 [1] : vector<16x32xf32> to vector<16xf32>
    %339 = vector.shape_cast %338 : vector<16xf32> to vector<16x1xf32>
    %cst_147 = arith.constant 3.200000e+01 : f32
    %340 = vector.broadcast %cst_147 : f32 to vector<16x1xf32>
    %341 = arith.divf %339, %340 : vector<16x1xf32>
    %cst_148 = arith.constant 9.99999996E-13 : f32
    %342 = vector.broadcast %cst_148 : f32 to vector<16x1xf32>
    %343 = arith.addf %341, %342 : vector<16x1xf32>
    %344 = math.rsqrt %343 : vector<16x1xf32>
    %345 = vector.broadcast %344 : vector<16x1xf32> to vector<16x32xf32>
    %346 = arith.mulf %336, %345 : vector<16x32xf32>
    %347 = vector.broadcast %328 : vector<1x32xf32> to vector<16x32xf32>
    %348 = arith.mulf %346, %347 : vector<16x32xf32>
    %349 = vector.broadcast %330 : vector<1x32xf32> to vector<16x32xf32>
    %350 = arith.addf %348, %349 : vector<16x32xf32>
    %c1_149 = arith.constant 1 : index
    %c0_150 = arith.constant 0 : index
    %c0_151 = arith.constant 0 : index
    %351 = vector.load %arg11[%c1_149, %c0_150, %c0_151] : memref<2x32x64xf32, #tpu.memory_space<vmem>>, vector<1x32x64xf32>
    %352 = vector.shape_cast %351 : vector<1x32x64xf32> to vector<32x64xf32>
    %cst_152 = arith.constant dense<0.000000e+00> : vector<16x64xf32>
    %353 = tpu.matmul %350, %352, %cst_152 {dimension_numbers = #tpu.dot_dimension_numbers<[1], [0], [0], [1], [0, 0, 1, 1], [], []>} : vector<16x32xf32>, vector<32x64xf32>, vector<16x64xf32> -> vector<16x64xf32>
    %c1_153 = arith.constant 1 : index
    %c0_154 = arith.constant 0 : index
    %c0_155 = arith.constant 0 : index
    %354 = vector.load %arg12[%c1_153, %c0_154, %c0_155] : memref<2x1x64xf32, #tpu.memory_space<vmem>>, vector<1x1x64xf32>
    %355 = vector.shape_cast %354 : vector<1x1x64xf32> to vector<1x64xf32>
    %356 = vector.broadcast %355 : vector<1x64xf32> to vector<16x64xf32>
    %357 = arith.addf %353, %356 : vector<16x64xf32>
    %cst_156 = arith.constant 5.000000e-01 : f32
    %358 = vector.broadcast %cst_156 : f32 to vector<16x64xf32>
    %359 = arith.mulf %358, %357 : vector<16x64xf32>
    %cst_157 = arith.constant 0.707106769 : f32
    %360 = vector.broadcast %cst_157 : f32 to vector<16x64xf32>
    %361 = arith.mulf %357, %360 : vector<16x64xf32>
    %cst_158 = arith.constant 0.000000e+00 : f32
    %362 = vector.broadcast %cst_158 : f32 to vector<16x64xf32>
    %363 = arith.cmpf oge, %361, %362 : vector<16x64xf32>
    %cst_159 = arith.constant 1.000000e+00 : f32
    %cst_160 = arith.constant -1.000000e+00 : f32
    %364 = vector.broadcast %cst_159 : f32 to vector<16x64xf32>
    %365 = vector.broadcast %cst_160 : f32 to vector<16x64xf32>
    %366 = arith.select %363, %364, %365 : vector<16x64xi1>, vector<16x64xf32>
    %367 = math.absf %361 : vector<16x64xf32>
    %cst_161 = arith.constant 0.327591091 : f32
    %368 = vector.broadcast %cst_161 : f32 to vector<16x64xf32>
    %369 = arith.mulf %368, %367 : vector<16x64xf32>
    %cst_162 = arith.constant 1.000000e+00 : f32
    %370 = vector.broadcast %cst_162 : f32 to vector<16x64xf32>
    %371 = arith.addf %370, %369 : vector<16x64xf32>
    %cst_163 = arith.constant 1.000000e+00 : f32
    %372 = vector.broadcast %cst_163 : f32 to vector<16x64xf32>
    %373 = arith.divf %372, %371 : vector<16x64xf32>
    %cst_164 = arith.constant 1.06140542 : f32
    %374 = vector.broadcast %cst_164 : f32 to vector<16x64xf32>
    %375 = arith.mulf %374, %373 : vector<16x64xf32>
    %cst_165 = arith.constant -1.45315206 : f32
    %376 = vector.broadcast %cst_165 : f32 to vector<16x64xf32>
    %377 = arith.addf %375, %376 : vector<16x64xf32>
    %378 = arith.mulf %377, %373 : vector<16x64xf32>
    %cst_166 = arith.constant 1.42141378 : f32
    %379 = vector.broadcast %cst_166 : f32 to vector<16x64xf32>
    %380 = arith.addf %378, %379 : vector<16x64xf32>
    %381 = arith.mulf %380, %373 : vector<16x64xf32>
    %cst_167 = arith.constant -0.284496725 : f32
    %382 = vector.broadcast %cst_167 : f32 to vector<16x64xf32>
    %383 = arith.addf %381, %382 : vector<16x64xf32>
    %384 = arith.mulf %383, %373 : vector<16x64xf32>
    %cst_168 = arith.constant 0.254829586 : f32
    %385 = vector.broadcast %cst_168 : f32 to vector<16x64xf32>
    %386 = arith.addf %384, %385 : vector<16x64xf32>
    %387 = arith.mulf %386, %373 : vector<16x64xf32>
    %cst_169 = arith.constant 0.000000e+00 : f32
    %388 = vector.broadcast %cst_169 : f32 to vector<16x64xf32>
    %389 = arith.subf %388, %367 : vector<16x64xf32>
    %390 = arith.mulf %389, %367 : vector<16x64xf32>
    %391 = math.exp %390 : vector<16x64xf32>
    %392 = arith.mulf %387, %391 : vector<16x64xf32>
    %cst_170 = arith.constant 1.000000e+00 : f32
    %393 = vector.broadcast %cst_170 : f32 to vector<16x64xf32>
    %394 = arith.subf %393, %392 : vector<16x64xf32>
    %395 = arith.mulf %366, %394 : vector<16x64xf32>
    %cst_171 = arith.constant 1.000000e+00 : f32
    %396 = vector.broadcast %cst_171 : f32 to vector<16x64xf32>
    %397 = arith.addf %396, %395 : vector<16x64xf32>
    %398 = arith.mulf %359, %397 : vector<16x64xf32>
    %c1_172 = arith.constant 1 : index
    %c0_173 = arith.constant 0 : index
    %c0_174 = arith.constant 0 : index
    %399 = vector.load %arg13[%c1_172, %c0_173, %c0_174] : memref<2x64x32xf32, #tpu.memory_space<vmem>>, vector<1x64x32xf32>
    %400 = vector.shape_cast %399 : vector<1x64x32xf32> to vector<64x32xf32>
    %cst_175 = arith.constant dense<0.000000e+00> : vector<16x32xf32>
    %401 = tpu.matmul %398, %400, %cst_175 {dimension_numbers = #tpu.dot_dimension_numbers<[1], [0], [0], [1], [0, 0, 1, 1], [], []>} : vector<16x64xf32>, vector<64x32xf32>, vector<16x32xf32> -> vector<16x32xf32>
    %c1_176 = arith.constant 1 : index
    %c0_177 = arith.constant 0 : index
    %c0_178 = arith.constant 0 : index
    %402 = vector.load %arg14[%c1_176, %c0_177, %c0_178] : memref<2x1x32xf32, #tpu.memory_space<vmem>>, vector<1x1x32xf32>
    %403 = vector.shape_cast %402 : vector<1x1x32xf32> to vector<1x32xf32>
    %404 = vector.broadcast %403 : vector<1x32xf32> to vector<16x32xf32>
    %405 = arith.addf %401, %404 : vector<16x32xf32>
    %406 = arith.addf %405, %350 : vector<16x32xf32>
    %c1_179 = arith.constant 1 : index
    %c0_180 = arith.constant 0 : index
    %c0_181 = arith.constant 0 : index
    %407 = vector.load %arg15[%c1_179, %c0_180, %c0_181] : memref<2x1x32xf32, #tpu.memory_space<vmem>>, vector<1x1x32xf32>
    %408 = vector.shape_cast %407 : vector<1x1x32xf32> to vector<1x32xf32>
    %c1_182 = arith.constant 1 : index
    %c0_183 = arith.constant 0 : index
    %c0_184 = arith.constant 0 : index
    %409 = vector.load %arg16[%c1_182, %c0_183, %c0_184] : memref<2x1x32xf32, #tpu.memory_space<vmem>>, vector<1x1x32xf32>
    %410 = vector.shape_cast %409 : vector<1x1x32xf32> to vector<1x32xf32>
    %cst_185 = arith.constant dense<0.000000e+00> : vector<16xf32>
    %411 = vector.multi_reduction <add>, %406, %cst_185 [1] : vector<16x32xf32> to vector<16xf32>
    %412 = vector.shape_cast %411 : vector<16xf32> to vector<16x1xf32>
    %cst_186 = arith.constant 3.200000e+01 : f32
    %413 = vector.broadcast %cst_186 : f32 to vector<16x1xf32>
    %414 = arith.divf %412, %413 : vector<16x1xf32>
    %415 = vector.broadcast %414 : vector<16x1xf32> to vector<16x32xf32>
    %416 = arith.subf %406, %415 : vector<16x32xf32>
    %417 = arith.mulf %416, %416 : vector<16x32xf32>
    %cst_187 = arith.constant dense<0.000000e+00> : vector<16xf32>
    %418 = vector.multi_reduction <add>, %417, %cst_187 [1] : vector<16x32xf32> to vector<16xf32>
    %419 = vector.shape_cast %418 : vector<16xf32> to vector<16x1xf32>
    %cst_188 = arith.constant 3.200000e+01 : f32
    %420 = vector.broadcast %cst_188 : f32 to vector<16x1xf32>
    %421 = arith.divf %419, %420 : vector<16x1xf32>
    %cst_189 = arith.constant 9.99999996E-13 : f32
    %422 = vector.broadcast %cst_189 : f32 to vector<16x1xf32>
    %423 = arith.addf %421, %422 : vector<16x1xf32>
    %424 = math.rsqrt %423 : vector<16x1xf32>
    %425 = vector.broadcast %424 : vector<16x1xf32> to vector<16x32xf32>
    %426 = arith.mulf %416, %425 : vector<16x32xf32>
    %427 = vector.broadcast %408 : vector<1x32xf32> to vector<16x32xf32>
    %428 = arith.mulf %426, %427 : vector<16x32xf32>
    %429 = vector.broadcast %410 : vector<1x32xf32> to vector<16x32xf32>
    %430 = arith.addf %428, %429 : vector<16x32xf32>
    %431 = tpu.iota {dimensions = array<i32: 1>} : vector<2x16xi32>
    %432 = tpu.iota {dimensions = array<i32: 0>} : vector<2x16xi32>
    %c8_i32 = arith.constant 8 : i32
    %433 = vector.broadcast %c8_i32 : i32 to vector<2x16xi32>
    %434 = arith.muli %432, %433 : vector<2x16xi32>
    %435 = arith.cmpi eq, %431, %434 : vector<2x16xi32>
    %436 = arith.extui %435 : vector<2x16xi1> to vector<2x16xi32>
    %437 = arith.sitofp %436 : vector<2x16xi32> to vector<2x16xf32>
    %cst_190 = arith.constant dense<0.000000e+00> : vector<2x32xf32>
    %438 = tpu.matmul %437, %430, %cst_190 {dimension_numbers = #tpu.dot_dimension_numbers<[1], [0], [0], [1], [0, 0, 1, 1], [], []>} : vector<2x16xf32>, vector<16x32xf32>, vector<2x32xf32> -> vector<2x32xf32>
    %c0_191 = arith.constant 0 : index
    %c0_192 = arith.constant 0 : index
    %439 = vector.load %arg17[%c0_191, %c0_192] : memref<32x32xf32, #tpu.memory_space<vmem>>, vector<32x32xf32>
    %cst_193 = arith.constant dense<0.000000e+00> : vector<2x32xf32>
    %440 = tpu.matmul %438, %439, %cst_193 {dimension_numbers = #tpu.dot_dimension_numbers<[1], [0], [0], [1], [0, 0, 1, 1], [], []>} : vector<2x32xf32>, vector<32x32xf32>, vector<2x32xf32> -> vector<2x32xf32>
    %c0_194 = arith.constant 0 : index
    %c0_195 = arith.constant 0 : index
    %441 = vector.load %arg18[%c0_194, %c0_195] : memref<1x32xf32, #tpu.memory_space<vmem>>, vector<1x32xf32>
    %442 = vector.broadcast %441 : vector<1x32xf32> to vector<2x32xf32>
    %443 = arith.addf %440, %442 : vector<2x32xf32>
    %444 = math.tanh %443 : vector<2x32xf32>
    %c0_196 = arith.constant 0 : index
    %c0_197 = arith.constant 0 : index
    %445 = vector.load %arg19[%c0_196, %c0_197] : memref<32x2xf32, #tpu.memory_space<vmem>>, vector<32x2xf32>
    %cst_198 = arith.constant dense<0.000000e+00> : vector<2x2xf32>
    %446 = tpu.matmul %444, %445, %cst_198 {dimension_numbers = #tpu.dot_dimension_numbers<[1], [0], [0], [1], [0, 0, 1, 1], [], []>} : vector<2x32xf32>, vector<32x2xf32>, vector<2x2xf32> -> vector<2x2xf32>
    %c0_199 = arith.constant 0 : index
    %c0_200 = arith.constant 0 : index
    %447 = vector.load %arg20[%c0_199, %c0_200] : memref<1x2xf32, #tpu.memory_space<vmem>>, vector<1x2xf32>
    %448 = vector.broadcast %447 : vector<1x2xf32> to vector<2x2xf32>
    %449 = arith.addf %446, %448 : vector<2x2xf32>
    %c0_201 = arith.constant 0 : index
    %c0_202 = arith.constant 0 : index
    %450 = vector.load %arg21[%c0_201, %c0_202] : memref<2x2xf32, #tpu.memory_space<vmem>>, vector<2x2xf32>
    tpu.vector_store %arg21[%c0_201, %c0_202], %449 {strides = array<i32>} : memref<2x2xf32, #tpu.memory_space<vmem>>, vector<2x2xf32>,
    return
  }
  func.func @transform_0(%arg0: i32) -> (i32, i32) {
    %c0_i32 = arith.constant 0 : i32
    %c0_i32_0 = arith.constant 0 : i32
    %c0_i32_1 = arith.constant 0 : i32
    return %c0_i32, %c0_i32_0 : i32, i32
  }
  func.func @transform_1(%arg0: i32) -> (i32, i32, i32) {
    %c0_i32 = arith.constant 0 : i32
    %c0_i32_0 = arith.constant 0 : i32
    %c0_i32_1 = arith.constant 0 : i32
    %c0_i32_2 = arith.constant 0 : i32
    return %c0_i32, %c0_i32_0, %c0_i32_1 : i32, i32, i32
  }
  func.func @transform_2(%arg0: i32) -> (i32, i32) {
    %c0_i32 = arith.constant 0 : i32
    %c0_i32_0 = arith.constant 0 : i32
    %c0_i32_1 = arith.constant 0 : i32
    return %c0_i32, %c0_i32_0 : i32, i32
  }
  func.func @transform_3(%arg0: i32) -> (i32, i32) {
    %c0_i32 = arith.constant 0 : i32
    %c0_i32_0 = arith.constant 0 : i32
    %c0_i32_1 = arith.constant 0 : i32
    return %c0_i32, %c0_i32_0 : i32, i32
  }
  func.func @transform_4(%arg0: i32) -> (i32, i32, i32) {
    %c0_i32 = arith.constant 0 : i32
    %c0_i32_0 = arith.constant 0 : i32
    %c0_i32_1 = arith.constant 0 : i32
    %c0_i32_2 = arith.constant 0 : i32
    return %c0_i32, %c0_i32_0, %c0_i32_1 : i32, i32, i32
  }
  func.func @transform_5(%arg0: i32) -> (i32, i32, i32) {
    %c0_i32 = arith.constant 0 : i32
    %c0_i32_0 = arith.constant 0 : i32
    %c0_i32_1 = arith.constant 0 : i32
    %c0_i32_2 = arith.constant 0 : i32
    return %c0_i32, %c0_i32_0, %c0_i32_1 : i32, i32, i32
  }
  func.func @transform_6(%arg0: i32) -> (i32, i32, i32) {
    %c0_i32 = arith.constant 0 : i32
    %c0_i32_0 = arith.constant 0 : i32
    %c0_i32_1 = arith.constant 0 : i32
    %c0_i32_2 = arith.constant 0 : i32
    return %c0_i32, %c0_i32_0, %c0_i32_1 : i32, i32, i32
  }
  func.func @transform_7(%arg0: i32) -> (i32, i32, i32) {
    %c0_i32 = arith.constant 0 : i32
    %c0_i32_0 = arith.constant 0 : i32
    %c0_i32_1 = arith.constant 0 : i32
    %c0_i32_2 = arith.constant 0 : i32
    return %c0_i32, %c0_i32_0, %c0_i32_1 : i32, i32, i32
  }
  func.func @transform_8(%arg0: i32) -> (i32, i32, i32) {
    %c0_i32 = arith.constant 0 : i32
    %c0_i32_0 = arith.constant 0 : i32
    %c0_i32_1 = arith.constant 0 : i32
    %c0_i32_2 = arith.constant 0 : i32
    return %c0_i32, %c0_i32_0, %c0_i32_1 : i32, i32, i32
  }
  func.func @transform_9(%arg0: i32) -> (i32, i32, i32) {
    %c0_i32 = arith.constant 0 : i32
    %c0_i32_0 = arith.constant 0 : i32
    %c0_i32_1 = arith.constant 0 : i32
    %c0_i32_2 = arith.constant 0 : i32
    return %c0_i32, %c0_i32_0, %c0_i32_1 : i32, i32, i32
  }
  func.func @transform_10(%arg0: i32) -> (i32, i32, i32) {
    %c0_i32 = arith.constant 0 : i32
    %c0_i32_0 = arith.constant 0 : i32
    %c0_i32_1 = arith.constant 0 : i32
    %c0_i32_2 = arith.constant 0 : i32
    return %c0_i32, %c0_i32_0, %c0_i32_1 : i32, i32, i32
  }
  func.func @transform_11(%arg0: i32) -> (i32, i32, i32) {
    %c0_i32 = arith.constant 0 : i32
    %c0_i32_0 = arith.constant 0 : i32
    %c0_i32_1 = arith.constant 0 : i32
    %c0_i32_2 = arith.constant 0 : i32
    return %c0_i32, %c0_i32_0, %c0_i32_1 : i32, i32, i32
  }
  func.func @transform_12(%arg0: i32) -> (i32, i32, i32) {
    %c0_i32 = arith.constant 0 : i32
    %c0_i32_0 = arith.constant 0 : i32
    %c0_i32_1 = arith.constant 0 : i32
    %c0_i32_2 = arith.constant 0 : i32
    return %c0_i32, %c0_i32_0, %c0_i32_1 : i32, i32, i32
  }
  func.func @transform_13(%arg0: i32) -> (i32, i32, i32) {
    %c0_i32 = arith.constant 0 : i32
    %c0_i32_0 = arith.constant 0 : i32
    %c0_i32_1 = arith.constant 0 : i32
    %c0_i32_2 = arith.constant 0 : i32
    return %c0_i32, %c0_i32_0, %c0_i32_1 : i32, i32, i32
  }
  func.func @transform_14(%arg0: i32) -> (i32, i32, i32) {
    %c0_i32 = arith.constant 0 : i32
    %c0_i32_0 = arith.constant 0 : i32
    %c0_i32_1 = arith.constant 0 : i32
    %c0_i32_2 = arith.constant 0 : i32
    return %c0_i32, %c0_i32_0, %c0_i32_1 : i32, i32, i32
  }
  func.func @transform_15(%arg0: i32) -> (i32, i32, i32) {
    %c0_i32 = arith.constant 0 : i32
    %c0_i32_0 = arith.constant 0 : i32
    %c0_i32_1 = arith.constant 0 : i32
    %c0_i32_2 = arith.constant 0 : i32
    return %c0_i32, %c0_i32_0, %c0_i32_1 : i32, i32, i32
  }
  func.func @transform_16(%arg0: i32) -> (i32, i32) {
    %c0_i32 = arith.constant 0 : i32
    %c0_i32_0 = arith.constant 0 : i32
    %c0_i32_1 = arith.constant 0 : i32
    return %c0_i32, %c0_i32_0 : i32, i32
  }
  func.func @transform_17(%arg0: i32) -> (i32, i32) {
    %c0_i32 = arith.constant 0 : i32
    %c0_i32_0 = arith.constant 0 : i32
    %c0_i32_1 = arith.constant 0 : i32
    return %c0_i32, %c0_i32_0 : i32, i32
  }
  func.func @transform_18(%arg0: i32) -> (i32, i32) {
    %c0_i32 = arith.constant 0 : i32
    %c0_i32_0 = arith.constant 0 : i32
    %c0_i32_1 = arith.constant 0 : i32
    return %c0_i32, %c0_i32_0 : i32, i32
  }
  func.func @transform_19(%arg0: i32) -> (i32, i32) {
    %c0_i32 = arith.constant 0 : i32
    %c0_i32_0 = arith.constant 0 : i32
    %c0_i32_1 = arith.constant 0 : i32
    return %c0_i32, %c0_i32_0 : i32, i32
  }
  func.func @transform_20(%arg0: i32) -> (i32, i32) {
    %c0_i32 = arith.constant 0 : i32
    %c0_i32_0 = arith.constant 0 : i32
    %c0_i32_1 = arith.constant 0 : i32
    return %c0_i32, %c0_i32_0 : i32, i32
  }
}

</mosaic_0001>

<llo_original>
// kernel: bert_sst2_forward.1
$region0: #{bert_sst2_forward.1}
  #allocation0 [shape = 'u32[]', space=smem, size = 0x4, offset = 0x4, fixed_abs, tag = 'smem constant byte address 0x4 - core index']
  #allocation1 [shape = 'u32[72,128]{1,0:T(1,128)}', space=vmem, size = 0x9000, scoped, tag = 'internal scratch']
  %s0 = inlined_call_operand.vmem [shape: f32[16,32], index: 0, kind: input, shape index: {}]
  %s1 = inlined_call_operand.vmem [shape: f32[2,1,8], index: 1, kind: input, shape index: {}]
  %s2 = inlined_call_operand.vmem [shape: f32[1,32], index: 2, kind: input, shape index: {}]
  %s3 = inlined_call_operand.vmem [shape: f32[1,32], index: 3, kind: input, shape index: {}]
  %s4 = inlined_call_operand.vmem [shape: f32[2,32,96], index: 4, kind: input, shape index: {}]
  %s5 = inlined_call_operand.vmem [shape: f32[2,1,96], index: 5, kind: input, shape index: {}]
  %s6 = inlined_call_operand.vmem [shape: f32[2,32,32], index: 6, kind: input, shape index: {}]
  %s7 = inlined_call_operand.vmem [shape: f32[2,1,32], index: 7, kind: input, shape index: {}]
  %s8 = inlined_call_operand.vmem [shape: f32[2,1,32], index: 8, kind: input, shape index: {}]
  %s9 = inlined_call_operand.vmem [shape: f32[2,1,32], index: 9, kind: input, shape index: {}]
  %s10 = inlined_call_operand.vmem [shape: f32[2,32,64], index: 10, kind: input, shape index: {}]
  %s11 = inlined_call_operand.vmem [shape: f32[2,1,64], index: 11, kind: input, shape index: {}]
  %s12 = inlined_call_operand.vmem [shape: f32[2,64,32], index: 12, kind: input, shape index: {}]
  %s13 = inlined_call_operand.vmem [shape: f32[2,1,32], index: 13, kind: input, shape index: {}]
  %s14 = inlined_call_operand.vmem [shape: f32[2,1,32], index: 14, kind: input, shape index: {}]
  %s15 = inlined_call_operand.vmem [shape: f32[2,1,32], index: 15, kind: input, shape index: {}]
  %s16 = inlined_call_operand.vmem [shape: f32[32,32], index: 16, kind: input, shape index: {}]
  %s17 = inlined_call_operand.vmem [shape: f32[1,32], index: 17, kind: input, shape index: {}]
  %s18 = inlined_call_operand.vmem [shape: f32[32,2], index: 18, kind: input, shape index: {}]
  %s19 = inlined_call_operand.vmem [shape: f32[1,2], index: 19, kind: input, shape index: {}]
  %s20 = inlined_call_operand.hbm [shape: f32[2,2], index: 20, kind: output, shape index: {}]
  %s21 = sld [smem:[#allocation0]]
  $region90: #{bert_sst2_forward.1} parent=0
    _
  %s23 = ssub.s32 1, %s21
  %s24 = scalar_select 0, %s23, %s21
  $region1: #{bert_sst2_forward.1} parent=0
    #allocation2 [shape = 'u8[1024]{0}', space=vmem, size = 0x400, scoped, tag = 'output window, operand 0, single buffered']
    #allocation3 [shape = 's32[1]{0}', space=sflag, size = 0x4, scoped, tag = 'scoped memory for bert_sst2_forward.1']
    %25 = vsyncpa [#allocation3], 0
    // Predicated region
    $region2: #{bert_sst2_forward.1} parent=1 // pred_check
      _
    $region3: #{bert_sst2_forward.1} parent=1 // pred_check_branch
      %27 = sbr.rel (0) target = $region5
    $region4: #{bert_sst2_forward.1} parent=1 // pred_region
      _
    $region5: #{bert_sst2_forward.1} parent=1 // pred_fallthru
      _
    // Predicated region
    $region6: #{bert_sst2_forward.1} parent=1 // pred_check
      _
    $region7: #{bert_sst2_forward.1} parent=1 // pred_check_branch
      %29 = sbr.rel (0) target = $region9
    $region8: #{bert_sst2_forward.1} parent=1 // pred_region
      _
    $region9: #{bert_sst2_forward.1} parent=1 // pred_fallthru
      _
    // Predicated region
    $region10: #{bert_sst2_forward.1} parent=1 // pred_check
      _
    $region11: #{bert_sst2_forward.1} parent=1 // pred_check_branch
      %31 = sbr.rel (0) target = $region13
    $region12: #{bert_sst2_forward.1} parent=1 // pred_region
      _
    $region13: #{bert_sst2_forward.1} parent=1 // pred_fallthru
      _
    // Predicated region
    $region14: #{bert_sst2_forward.1} parent=1 // pred_check
      _
    $region15: #{bert_sst2_forward.1} parent=1 // pred_check_branch
      %33 = sbr.rel (0) target = $region17
    $region16: #{bert_sst2_forward.1} parent=1 // pred_region
      _
    $region17: #{bert_sst2_forward.1} parent=1 // pred_fallthru
      _
    // Predicated region
    $region18: #{bert_sst2_forward.1} parent=1 // pred_check
      _
    $region19: #{bert_sst2_forward.1} parent=1 // pred_check_branch
      %35 = sbr.rel (0) target = $region21
    $region20: #{bert_sst2_forward.1} parent=1 // pred_region
      _
    $region21: #{bert_sst2_forward.1} parent=1 // pred_fallthru
      _
    // Predicated region
    $region22: #{bert_sst2_forward.1} parent=1 // pred_check
      _
    $region23: #{bert_sst2_forward.1} parent=1 // pred_check_branch
      %37 = sbr.rel (0) target = $region25
    $region24: #{bert_sst2_forward.1} parent=1 // pred_region
      _
    $region25: #{bert_sst2_forward.1} parent=1 // pred_fallthru
      _
    // Predicated region
    $region26: #{bert_sst2_forward.1} parent=1 // pred_check
      _
    $region27: #{bert_sst2_forward.1} parent=1 // pred_check_branch
      %39 = sbr.rel (0) target = $region29
    $region28: #{bert_sst2_forward.1} parent=1 // pred_region
      _
    $region29: #{bert_sst2_forward.1} parent=1 // pred_fallthru
      _
    // Predicated region
    $region30: #{bert_sst2_forward.1} parent=1 // pred_check
      _
    $region31: #{bert_sst2_forward.1} parent=1 // pred_check_branch
      %41 = sbr.rel (0) target = $region33
    $region32: #{bert_sst2_forward.1} parent=1 // pred_region
      _
    $region33: #{bert_sst2_forward.1} parent=1 // pred_fallthru
      _
    // Predicated region
    $region34: #{bert_sst2_forward.1} parent=1 // pred_check
      _
    $region35: #{bert_sst2_forward.1} parent=1 // pred_check_branch
      %43 = sbr.rel (0) target = $region37
    $region36: #{bert_sst2_forward.1} parent=1 // pred_region
      _
    $region37: #{bert_sst2_forward.1} parent=1 // pred_fallthru
      _
    // Predicated region
    $region38: #{bert_sst2_forward.1} parent=1 // pred_check
      _
    $region39: #{bert_sst2_forward.1} parent=1 // pred_check_branch
      %45 = sbr.rel (0) target = $region41
    $region40: #{bert_sst2_forward.1} parent=1 // pred_region
      _
    $region41: #{bert_sst2_forward.1} parent=1 // pred_fallthru
      _
    // Predicated region
    $region42: #{bert_sst2_forward.1} parent=1 // pred_check
      _
    $region43: #{bert_sst2_forward.1} parent=1 // pred_check_branch
      %47 = sbr.rel (0) target = $region45
    $region44: #{bert_sst2_forward.1} parent=1 // pred_region
      _
    $region45: #{bert_sst2_forward.1} parent=1 // pred_fallthru
      _
    // Predicated region
    $region46: #{bert_sst2_forward.1} parent=1 // pred_check
      _
    $region47: #{bert_sst2_forward.1} parent=1 // pred_check_branch
      %49 = sbr.rel (0) target = $region49
    $region48: #{bert_sst2_forward.1} parent=1 // pred_region
      _
    $region49: #{bert_sst2_forward.1} parent=1 // pred_fallthru
      _
    // Predicated region
    $region50: #{bert_sst2_forward.1} parent=1 // pred_check
      _
    $region51: #{bert_sst2_forward.1} parent=1 // pred_check_branch
      %51 = sbr.rel (0) target = $region53
    $region52: #{bert_sst2_forward.1} parent=1 // pred_region
      _
    $region53: #{bert_sst2_forward.1} parent=1 // pred_fallthru
      _
    // Predicated region
    $region54: #{bert_sst2_forward.1} parent=1 // pred_check
      _
    $region55: #{bert_sst2_forward.1} parent=1 // pred_check_branch
      %53 = sbr.rel (0) target = $region57
    $region56: #{bert_sst2_forward.1} parent=1 // pred_region
      _
    $region57: #{bert_sst2_forward.1} parent=1 // pred_fallthru
      _
    // Predicated region
    $region58: #{bert_sst2_forward.1} parent=1 // pred_check
      _
    $region59: #{bert_sst2_forward.1} parent=1 // pred_check_branch
      %55 = sbr.rel (0) target = $region61
    $region60: #{bert_sst2_forward.1} parent=1 // pred_region
      _
    $region61: #{bert_sst2_forward.1} parent=1 // pred_fallthru
      _
    // Predicated region
    $region62: #{bert_sst2_forward.1} parent=1 // pred_check
      _
    $region63: #{bert_sst2_forward.1} parent=1 // pred_check_branch
      %57 = sbr.rel (0) target = $region65
    $region64: #{bert_sst2_forward.1} parent=1 // pred_region
      _
    $region65: #{bert_sst2_forward.1} parent=1 // pred_fallthru
      _
    // Predicated region
    $region66: #{bert_sst2_forward.1} parent=1 // pred_check
      _
    $region67: #{bert_sst2_forward.1} parent=1 // pred_check_branch
      %59 = sbr.rel (0) target = $region69
    $region68: #{bert_sst2_forward.1} parent=1 // pred_region
      _
    $region69: #{bert_sst2_forward.1} parent=1 // pred_fallthru
      _
    // Predicated region
    $region70: #{bert_sst2_forward.1} parent=1 // pred_check
      _
    $region71: #{bert_sst2_forward.1} parent=1 // pred_check_branch
      %61 = sbr.rel (0) target = $region73
    $region72: #{bert_sst2_forward.1} parent=1 // pred_region
      _
    $region73: #{bert_sst2_forward.1} parent=1 // pred_fallthru
      _
    // Predicated region
    $region74: #{bert_sst2_forward.1} parent=1 // pred_check
      _
    $region75: #{bert_sst2_forward.1} parent=1 // pred_check_branch
      %63 = sbr.rel (0) target = $region77
    $region76: #{bert_sst2_forward.1} parent=1 // pred_region
      _
    $region77: #{bert_sst2_forward.1} parent=1 // pred_fallthru
      _
    // Predicated region
    $region78: #{bert_sst2_forward.1} parent=1 // pred_check
      _
    $region79: #{bert_sst2_forward.1} parent=1 // pred_check_branch
      %65 = sbr.rel (0) target = $region81
    $region80: #{bert_sst2_forward.1} parent=1 // pred_region
      _
    $region81: #{bert_sst2_forward.1} parent=1 // pred_fallthru
      _
    %v66 = vld [vmem:[%s0] sm:$0xff]
    %v67 = vld [vmem:[%s0 + $0x8] sm:$0xff]
    %v68 = vld [vmem:[%s2] sm:$0x1]
    %v69 = vld [vmem:[%s3] sm:$0x1]
    %vm70 = vcmask 261120
    %v71 = vsel %vm70, %v66, 0.0
    %72 = vadd.xlane.f32.xlu0 %v71
    %v73 = vpop.xlane.xlu0 %72
    %v74 = vsel %vm70, %v67, 0.0
    %75 = vadd.xlane.f32.xlu0 %v74
    %v76 = vpop.xlane.xlu0 %75
    %v77 = vrcp.pop 32.0
    %v78 = vmul.f32 32.0, %v77
    %v79 = vsub.f32 1.0, %v78
    %v80 = vmul.f32 %v77, %v79
    %v81 = vadd.f32 %v77, %v80
    %vm82 = vweird.f32 %v77
    %v83 = vsel %vm82, %v77, %v81
    %v84 = vmul.f32 %v73, %v83
    %v85 = vmul.f32 %v76, %v83
    %v86 = vsub.f32 %v66, %v84
    %v87 = vsub.f32 %v67, %v85
    %v88 = vmul.f32 %v86, %v86
    %v89 = vmul.f32 %v87, %v87
    %v90 = vsel %vm70, %v88, 0.0
    %91 = vadd.xlane.f32.xlu0 %v90
    %v92 = vpop.xlane.xlu0 %91
    %v93 = vsel %vm70, %v89, 0.0
    %94 = vadd.xlane.f32.xlu0 %v93
    %v95 = vpop.xlane.xlu0 %94
    %v96 = vmul.f32 %v92, %v83
    %v97 = vmul.f32 %v95, %v83
    %v98 = vadd.f32 %v96, 1e-12
    %v99 = vadd.f32 %v97, 1e-12
    %v100 = vrsqrt.pop %v98
    %v101 = vmul.f32 %v100, %v98
    %v102 = vmul.f32 %v101, %v100
    %v103 = vmul.f32 0.5, %v102
    %v104 = vsub.f32 1.5, %v103
    %v105 = vmul.f32 %v100, %v104
    %vm106 = vweird.f32 %v98
    %vm107 = vweird.f32 %v100
    %vm108 = vmor %vm106, %vm107
    %v109 = vsel %vm108, %v100, %v105
    %v110 = vrsqrt.pop %v99
    %v111 = vmul.f32 %v110, %v99
    %v112 = vmul.f32 %v111, %v110
    %v113 = vmul.f32 0.5, %v112
    %v114 = vsub.f32 1.5, %v113
    %v115 = vmul.f32 %v110, %v114
    %vm116 = vweird.f32 %v99
    %vm117 = vweird.f32 %v110
    %vm118 = vmor %vm116, %vm117
    %v119 = vsel %vm118, %v110, %v115
    %v120 = vmul.f32 %v86, %v109
    %v121 = vmul.f32 %v87, %v119
    %v123 = vperm.slane %v68, 0
    %v125 = vmul.f32 %v120, %v123
    %v126 = vmul.f32 %v121, %v123
    %v128 = vperm.slane %v69, 0
    %v130 = vadd.f32 %v125, %v128
    %v131 = vadd.f32 %v126, %v128
    %v132 = vld [vmem:[%s4] sm:$0xff]
    %v133 = vld [vmem:[%s4 + $0x8] sm:$0xff]
    %v134 = vld [vmem:[%s4 + $0x10] sm:$0xff]
    %v135 = vld [vmem:[%s4 + $0x18] sm:$0xff]
    %v136 = vld [vmem:[%s6] sm:$0xff]
    %v137 = vld [vmem:[%s6 + $0x8] sm:$0xff]
    %v138 = vld [vmem:[%s6 + $0x10] sm:$0xff]
    %v139 = vld [vmem:[%s6 + $0x18] sm:$0xff]
    %v140 = vld [vmem:[%s5] sm:$0x1]
    %v142 = vperm.slane %v140, 0
    %v145 = vsel %vm70, %v130, 0
    %v148 = vsel %vm70, %v131, 0
    %150 = vmatpush.msra.mxu0 0.0
    %151 = vmatpush.msra.mxu0 0.0
    %152 = vmatpush.msra.mxu0 0.0
    %153 = vmatpush.msra.mxu0 0.0
    %154 = vmatpush.msra.mxu0 0.0
    %155 = vmatpush.msra.mxu0 0.0
    %156 = vmatpush.msra.mxu0 0.0
    %157 = vmatpush.msra.mxu0 0.0
    %158 = vmatpush.msra.mxu0 0.0
    %159 = vmatpush.msra.mxu0 0.0
    %160 = vmatpush.msra.mxu0 0.0
    %161 = vmatpush.msra.mxu0 0.0
    %162 = vmatpush.msra.mxu0 %v135
    %163 = vmatpush.msra.mxu0 %v134
    %164 = vmatpush.msra.mxu0 %v133
    %165 = vmatpush.msra.mxu0 %v132
    %166 = vmatmul.f32.gmra.mxu0 %v145
    %v167 = vpop.f32.mrf.mxu0
    %v168 = vadd.f32 %v142, %v167
    %169 = vmatmul.f32.gmra.mxu0 %v148
    %v170 = vpop.f32.mrf.mxu0
    %v171 = vadd.f32 %v142, %v170
    %172 = vdwg.mxu0
    %v173 = vld [vmem:[%s1] sm:$0x1]
    %v175 = vperm.slane %v173, 0
    %178 = vrot.lane.b32.xlu0 %v168, 96
    %v179 = vpop.permute.xlu0 %178
    %vm180 = vcmask 130048
    %v181 = vsel %vm180, %v168, 0
    %v183 = vsel %vm180, %v179, 0
    %185 = vmatpush.xpose.msra.mxu0 0.0
    %186 = vmatpush.xpose.msra.mxu0 0.0
    %187 = vmatpush.xpose.msra.mxu0 0.0
    %188 = vmatpush.xpose.msra.mxu0 0.0
    %189 = vmatpush.xpose.msra.mxu0 0.0
    %190 = vmatpush.xpose.msra.mxu0 0.0
    %191 = vmatpush.xpose.msra.mxu0 0.0
    %192 = vmatpush.xpose.msra.mxu0 0.0
    %193 = vmatpush.xpose.msra.mxu0 0.0
    %194 = vmatpush.xpose.msra.mxu0 0.0
    %195 = vmatpush.xpose.msra.mxu0 0.0
    %196 = vmatpush.xpose.msra.mxu0 0.0
    %197 = vmatpush.xpose.msra.mxu0 0.0
    %198 = vmatpush.xpose.msra.mxu0 0.0
    %199 = vmatpush.xpose.msra.mxu0 0.0
    %200 = vmatpush.xpose.msra.mxu0 %v183
    %201 = vmatmul.f32.gmra.mxu0 %v181
    %v202 = vpop.f32.mrf.mxu0
    %v203 = vadd.f32 %v175, %v202
    %204 = vdwg.mxu0
    %vm205 = vcmask 64512
    %v206 = vsel %vm205, %v203, -inf
    %207 = vmax.xlane.f32.xlu0 %v206
    %v208 = vpop.xlane.xlu0 %207
    %v209 = vsub.f32 %v203, %v208
    %v210 = vmul.f32 %v209, 1.442695
    %v211 = vpow.pop %v210
    %v212 = vsel %vm205, %v211, 0.0
    %213 = vadd.xlane.f32.xlu0 %v212
    %v214 = vpop.xlane.xlu0 %213
    %v215 = vrcp.pop %v214
    %v216 = vmul.f32 %v211, %v215
    %217 = vrot.lane.b32.xlu0 %v168, 64
    %v218 = vpop.permute.xlu0 %217
    %v221 = vsel %vm205, %v216, 0
    %223 = vmatpush.msra.mxu0 0.0
    %224 = vmatpush.msra.mxu0 0.0
    %225 = vmatpush.msra.mxu0 0.0
    %226 = vmatpush.msra.mxu0 0.0
    %227 = vmatpush.msra.mxu0 0.0
    %228 = vmatpush.msra.mxu0 0.0
    %229 = vmatpush.msra.mxu0 0.0
    %230 = vmatpush.msra.mxu0 0.0
    %231 = vmatpush.msra.mxu0 0.0
    %232 = vmatpush.msra.mxu0 0.0
    %233 = vmatpush.msra.mxu0 0.0
    %234 = vmatpush.msra.mxu0 0.0
    %235 = vmatpush.msra.mxu0 0.0
    %236 = vmatpush.msra.mxu0 0.0
    %237 = vmatpush.msra.mxu0 0.0
    %238 = vmatpush.msra.mxu0 %v218
    %239 = vmatmul.f32.gmra.mxu0 %v221
    %v240 = vpop.f32.mrf.mxu0
    %v241 = vadd.f32 0.0, %v240
    %242 = vdwg.mxu0
    %243 = vrot.lane.b32.xlu0 %v168, 112
    %v244 = vpop.permute.xlu0 %243
    %245 = vrot.lane.b32.xlu0 %v168, 80
    %v246 = vpop.permute.xlu0 %245
    %v247 = vsel %vm180, %v244, 0
    %v249 = vsel %vm180, %v246, 0
    %251 = vmatpush.xpose.msra.mxu0 0.0
    %252 = vmatpush.xpose.msra.mxu0 0.0
    %253 = vmatpush.xpose.msra.mxu0 0.0
    %254 = vmatpush.xpose.msra.mxu0 0.0
    %255 = vmatpush.xpose.msra.mxu0 0.0
    %256 = vmatpush.xpose.msra.mxu0 0.0
    %257 = vmatpush.xpose.msra.mxu0 0.0
    %258 = vmatpush.xpose.msra.mxu0 0.0
    %259 = vmatpush.xpose.msra.mxu0 0.0
    %260 = vmatpush.xpose.msra.mxu0 0.0
    %261 = vmatpush.xpose.msra.mxu0 0.0
    %262 = vmatpush.xpose.msra.mxu0 0.0
    %263 = vmatpush.xpose.msra.mxu0 0.0
    %264 = vmatpush.xpose.msra.mxu0 0.0
    %265 = vmatpush.xpose.msra.mxu0 0.0
    %266 = vmatpush.xpose.msra.mxu0 %v249
    %267 = vmatmul.f32.gmra.mxu0 %v247
    %v268 = vpop.f32.mrf.mxu0
    %v269 = vadd.f32 %v175, %v268
    %270 = vdwg.mxu0
    %v271 = vsel %vm205, %v269, -inf
    %272 = vmax.xlane.f32.xlu0 %v271
    %v273 = vpop.xlane.xlu0 %272
    %v274 = vsub.f32 %v269, %v273
    %v275 = vmul.f32 %v274, 1.442695
    %v276 = vpow.pop %v275
    %v277 = vsel %vm205, %v276, 0.0
    %278 = vadd.xlane.f32.xlu0 %v277
    %v279 = vpop.xlane.xlu0 %278
    %v280 = vrcp.pop %v279
    %v281 = vmul.f32 %v276, %v280
    %282 = vrot.lane.b32.xlu0 %v168, 48
    %v283 = vpop.permute.xlu0 %282
    %v286 = vsel %vm205, %v281, 0
    %288 = vmatpush.msra.mxu0 0.0
    %289 = vmatpush.msra.mxu0 0.0
    %290 = vmatpush.msra.mxu0 0.0
    %291 = vmatpush.msra.mxu0 0.0
    %292 = vmatpush.msra.mxu0 0.0
    %293 = vmatpush.msra.mxu0 0.0
    %294 = vmatpush.msra.mxu0 0.0
    %295 = vmatpush.msra.mxu0 0.0
    %296 = vmatpush.msra.mxu0 0.0
    %297 = vmatpush.msra.mxu0 0.0
    %298 = vmatpush.msra.mxu0 0.0
    %299 = vmatpush.msra.mxu0 0.0
    %300 = vmatpush.msra.mxu0 0.0
    %301 = vmatpush.msra.mxu0 0.0
    %302 = vmatpush.msra.mxu0 0.0
    %303 = vmatpush.msra.mxu0 %v283
    %304 = vmatmul.f32.gmra.mxu0 %v286
    %v305 = vpop.f32.mrf.mxu0
    %v306 = vadd.f32 0.0, %v305
    %307 = vdwg.mxu0
    %v309 = vsel %vm180, %v306, 0
    %311 = vmatpush.msra.mxu0 0.0
    %312 = vmatpush.msra.mxu0 0.0
    %313 = vmatpush.msra.mxu0 0.0
    %314 = vmatpush.msra.mxu0 0.0
    %315 = vmatpush.msra.mxu0 0.0
    %316 = vmatpush.msra.mxu0 0.0
    %317 = vmatpush.msra.mxu0 0.0
    %318 = vmatpush.msra.mxu0 0.0
    %319 = vmatpush.msra.mxu0 0.0
    %320 = vmatpush.msra.mxu0 0.0
    %321 = vmatpush.msra.mxu0 0.0
    %322 = vmatpush.msra.mxu0 0.0
    %323 = vmatpush.msra.mxu0 0.0
    %324 = vmatpush.msra.mxu0 0.0
    %325 = vmatpush.msra.mxu0 %v139
    %326 = vmatpush.msra.mxu0 %v138
    %327 = vmatmul.f32.gmra.mxu0 %v309
    %v328 = vpop.f32.mrf.mxu0
    %v329 = vadd.f32 0.0, %v328
    %330 = vdwg.mxu0
    %v332 = vsel %vm180, %v241, 0
    %334 = vmatpush.msra.mxu0 0.0
    %335 = vmatpush.msra.mxu0 0.0
    %336 = vmatpush.msra.mxu0 0.0
    %337 = vmatpush.msra.mxu0 0.0
    %338 = vmatpush.msra.mxu0 0.0
    %339 = vmatpush.msra.mxu0 0.0
    %340 = vmatpush.msra.mxu0 0.0
    %341 = vmatpush.msra.mxu0 0.0
    %342 = vmatpush.msra.mxu0 0.0
    %343 = vmatpush.msra.mxu0 0.0
    %344 = vmatpush.msra.mxu0 0.0
    %345 = vmatpush.msra.mxu0 0.0
    %346 = vmatpush.msra.mxu0 0.0
    %347 = vmatpush.msra.mxu0 0.0
    %348 = vmatpush.msra.mxu0 %v137
    %349 = vmatpush.msra.mxu0 %v136
    %350 = vmatmul.f32.gmra.mxu0 %v332
    %v351 = vpop.f32.mrf.mxu0
    %v352 = vadd.f32 %v329, %v351
    %353 = vdwg.mxu0
    %s354 = scalar_lea.vmem %s1, 1
    %v355 = vld [vmem:[%s354] sm:$0x1]
    %v357 = vperm.slane %v355, 0
    %360 = vrot.lane.b32.xlu0 %v171, 96
    %v361 = vpop.permute.xlu0 %360
    %v362 = vsel %vm180, %v171, 0
    %v364 = vsel %vm180, %v361, 0
    %366 = vmatpush.xpose.msra.mxu0 0.0
    %367 = vmatpush.xpose.msra.mxu0 0.0
    %368 = vmatpush.xpose.msra.mxu0 0.0
    %369 = vmatpush.xpose.msra.mxu0 0.0
    %370 = vmatpush.xpose.msra.mxu0 0.0
    %371 = vmatpush.xpose.msra.mxu0 0.0
    %372 = vmatpush.xpose.msra.mxu0 0.0
    %373 = vmatpush.xpose.msra.mxu0 0.0
    %374 = vmatpush.xpose.msra.mxu0 0.0
    %375 = vmatpush.xpose.msra.mxu0 0.0
    %376 = vmatpush.xpose.msra.mxu0 0.0
    %377 = vmatpush.xpose.msra.mxu0 0.0
    %378 = vmatpush.xpose.msra.mxu0 0.0
    %379 = vmatpush.xpose.msra.mxu0 0.0
    %380 = vmatpush.xpose.msra.mxu0 0.0
    %381 = vmatpush.xpose.msra.mxu0 %v364
    %382 = vmatmul.f32.gmra.mxu0 %v362
    %v383 = vpop.f32.mrf.mxu0
    %v384 = vadd.f32 %v357, %v383
    %385 = vdwg.mxu0
    %v386 = vsel %vm205, %v384, -inf
    %387 = vmax.xlane.f32.xlu0 %v386
    %v388 = vpop.xlane.xlu0 %387
    %v389 = vsub.f32 %v384, %v388
    %v390 = vmul.f32 %v389, 1.442695
    %v391 = vpow.pop %v390
    %v392 = vsel %vm205, %v391, 0.0
    %393 = vadd.xlane.f32.xlu0 %v392
    %v394 = vpop.xlane.xlu0 %393
    %v395 = vrcp.pop %v394
    %v396 = vmul.f32 %v391, %v395
    %397 = vrot.lane.b32.xlu0 %v171, 64
    %v398 = vpop.permute.xlu0 %397
    %v401 = vsel %vm205, %v396, 0
    %403 = vmatpush.msra.mxu0 0.0
    %404 = vmatpush.msra.mxu0 0.0
    %405 = vmatpush.msra.mxu0 0.0
    %406 = vmatpush.msra.mxu0 0.0
    %407 = vmatpush.msra.mxu0 0.0
    %408 = vmatpush.msra.mxu0 0.0
    %409 = vmatpush.msra.mxu0 0.0
    %410 = vmatpush.msra.mxu0 0.0
    %411 = vmatpush.msra.mxu0 0.0
    %412 = vmatpush.msra.mxu0 0.0
    %413 = vmatpush.msra.mxu0 0.0
    %414 = vmatpush.msra.mxu0 0.0
    %415 = vmatpush.msra.mxu0 0.0
    %416 = vmatpush.msra.mxu0 0.0
    %417 = vmatpush.msra.mxu0 0.0
    %418 = vmatpush.msra.mxu0 %v398
    %419 = vmatmul.f32.gmra.mxu0 %v401
    %v420 = vpop.f32.mrf.mxu0
    %v421 = vadd.f32 0.0, %v420
    %422 = vdwg.mxu0
    %423 = vrot.lane.b32.xlu0 %v171, 112
    %v424 = vpop.permute.xlu0 %423
    %425 = vrot.lane.b32.xlu0 %v171, 80
    %v426 = vpop.permute.xlu0 %425
    %v427 = vsel %vm180, %v424, 0
    %v429 = vsel %vm180, %v426, 0
    %431 = vmatpush.xpose.msra.mxu0 0.0
    %432 = vmatpush.xpose.msra.mxu0 0.0
    %433 = vmatpush.xpose.msra.mxu0 0.0
    %434 = vmatpush.xpose.msra.mxu0 0.0
    %435 = vmatpush.xpose.msra.mxu0 0.0
    %436 = vmatpush.xpose.msra.mxu0 0.0
    %437 = vmatpush.xpose.msra.mxu0 0.0
    %438 = vmatpush.xpose.msra.mxu0 0.0
    %439 = vmatpush.xpose.msra.mxu0 0.0
    %440 = vmatpush.xpose.msra.mxu0 0.0
    %441 = vmatpush.xpose.msra.mxu0 0.0
    %442 = vmatpush.xpose.msra.mxu0 0.0
    %443 = vmatpush.xpose.msra.mxu0 0.0
    %444 = vmatpush.xpose.msra.mxu0 0.0
    %445 = vmatpush.xpose.msra.mxu0 0.0
    %446 = vmatpush.xpose.msra.mxu0 %v429
    %447 = vmatmul.f32.gmra.mxu0 %v427
    %v448 = vpop.f32.mrf.mxu0
    %v449 = vadd.f32 %v357, %v448
    %450 = vdwg.mxu0
    %v451 = vsel %vm205, %v449, -inf
    %452 = vmax.xlane.f32.xlu0 %v451
    %v453 = vpop.xlane.xlu0 %452
    %v454 = vsub.f32 %v449, %v453
    %v455 = vmul.f32 %v454, 1.442695
    %v456 = vpow.pop %v455
    %v457 = vsel %vm205, %v456, 0.0
    %458 = vadd.xlane.f32.xlu0 %v457
    %v459 = vpop.xlane.xlu0 %458
    %v460 = vrcp.pop %v459
    %v461 = vmul.f32 %v456, %v460
    %462 = vrot.lane.b32.xlu0 %v171, 48
    %v463 = vpop.permute.xlu0 %462
    %v466 = vsel %vm205, %v461, 0
    %468 = vmatpush.msra.mxu0 0.0
    %469 = vmatpush.msra.mxu0 0.0
    %470 = vmatpush.msra.mxu0 0.0
    %471 = vmatpush.msra.mxu0 0.0
    %472 = vmatpush.msra.mxu0 0.0
    %473 = vmatpush.msra.mxu0 0.0
    %474 = vmatpush.msra.mxu0 0.0
    %475 = vmatpush.msra.mxu0 0.0
    %476 = vmatpush.msra.mxu0 0.0
    %477 = vmatpush.msra.mxu0 0.0
    %478 = vmatpush.msra.mxu0 0.0
    %479 = vmatpush.msra.mxu0 0.0
    %480 = vmatpush.msra.mxu0 0.0
    %481 = vmatpush.msra.mxu0 0.0
    %482 = vmatpush.msra.mxu0 0.0
    %483 = vmatpush.msra.mxu0 %v463
    %484 = vmatmul.f32.gmra.mxu0 %v466
    %v485 = vpop.f32.mrf.mxu0
    %v486 = vadd.f32 0.0, %v485
    %487 = vdwg.mxu0
    %v489 = vsel %vm180, %v486, 0
    %491 = vmatpush.msra.mxu0 0.0
    %492 = vmatpush.msra.mxu0 0.0
    %493 = vmatpush.msra.mxu0 0.0
    %494 = vmatpush.msra.mxu0 0.0
    %495 = vmatpush.msra.mxu0 0.0
    %496 = vmatpush.msra.mxu0 0.0
    %497 = vmatpush.msra.mxu0 0.0
    %498 = vmatpush.msra.mxu0 0.0
    %499 = vmatpush.msra.mxu0 0.0
    %500 = vmatpush.msra.mxu0 0.0
    %501 = vmatpush.msra.mxu0 0.0
    %502 = vmatpush.msra.mxu0 0.0
    %503 = vmatpush.msra.mxu0 0.0
    %504 = vmatpush.msra.mxu0 0.0
    %505 = vmatpush.msra.mxu0 %v139
    %506 = vmatpush.msra.mxu0 %v138
    %507 = vmatmul.f32.gmra.mxu0 %v489
    %v508 = vpop.f32.mrf.mxu0
    %v509 = vadd.f32 0.0, %v508
    %510 = vdwg.mxu0
    %v512 = vsel %vm180, %v421, 0
    %514 = vmatpush.msra.mxu0 0.0
    %515 = vmatpush.msra.mxu0 0.0
    %516 = vmatpush.msra.mxu0 0.0
    %517 = vmatpush.msra.mxu0 0.0
    %518 = vmatpush.msra.mxu0 0.0
    %519 = vmatpush.msra.mxu0 0.0
    %520 = vmatpush.msra.mxu0 0.0
    %521 = vmatpush.msra.mxu0 0.0
    %522 = vmatpush.msra.mxu0 0.0
    %523 = vmatpush.msra.mxu0 0.0
    %524 = vmatpush.msra.mxu0 0.0
    %525 = vmatpush.msra.mxu0 0.0
    %526 = vmatpush.msra.mxu0 0.0
    %527 = vmatpush.msra.mxu0 0.0
    %528 = vmatpush.msra.mxu0 %v137
    %529 = vmatpush.msra.mxu0 %v136
    %530 = vmatmul.f32.gmra.mxu0 %v512
    %v531 = vpop.f32.mrf.mxu0
    %v532 = vadd.f32 %v509, %v531
    %533 = vdwg.mxu0
    %v534 = vld [vmem:[%s7] sm:$0x1]
    %v536 = vperm.slane %v534, 0
    %v538 = vadd.f32 %v352, %v536
    %v539 = vadd.f32 %v532, %v536
    %v540 = vadd.f32 %v538, %v130
    %v541 = vadd.f32 %v539, %v131
    %v542 = vld [vmem:[%s8] sm:$0x1]
    %v543 = vld [vmem:[%s9] sm:$0x1]
    %v544 = vsel %vm70, %v540, 0.0
    %545 = vadd.xlane.f32.xlu0 %v544
    %v546 = vpop.xlane.xlu0 %545
    %v547 = vsel %vm70, %v541, 0.0
    %548 = vadd.xlane.f32.xlu0 %v547
    %v549 = vpop.xlane.xlu0 %548
    %v550 = vmul.f32 %v546, %v83
    %v551 = vmul.f32 %v549, %v83
    %v552 = vsub.f32 %v540, %v550
    %v553 = vsub.f32 %v541, %v551
    %v554 = vmul.f32 %v552, %v552
    %v555 = vmul.f32 %v553, %v553
    %v556 = vsel %vm70, %v554, 0.0
    %557 = vadd.xlane.f32.xlu0 %v556
    %v558 = vpop.xlane.xlu0 %557
    %v559 = vsel %vm70, %v555, 0.0
    %560 = vadd.xlane.f32.xlu0 %v559
    %v561 = vpop.xlane.xlu0 %560
    %v562 = vmul.f32 %v558, %v83
    %v563 = vmul.f32 %v561, %v83
    %v564 = vadd.f32 %v562, 1e-12
    %v565 = vadd.f32 %v563, 1e-12
    %v566 = vrsqrt.pop %v564
    %v567 = vmul.f32 %v566, %v564
    %v568 = vmul.f32 %v567, %v566
    %v569 = vmul.f32 0.5, %v568
    %v570 = vsub.f32 1.5, %v569
    %v571 = vmul.f32 %v566, %v570
    %vm572 = vweird.f32 %v564
    %vm573 = vweird.f32 %v566
    %vm574 = vmor %vm572, %vm573
    %v575 = vsel %vm574, %v566, %v571
    %v576 = vrsqrt.pop %v565
    %v577 = vmul.f32 %v576, %v565
    %v578 = vmul.f32 %v577, %v576
    %v579 = vmul.f32 0.5, %v578
    %v580 = vsub.f32 1.5, %v579
    %v581 = vmul.f32 %v576, %v580
    %vm582 = vweird.f32 %v565
    %vm583 = vweird.f32 %v576
    %vm584 = vmor %vm582, %vm583
    %v585 = vsel %vm584, %v576, %v581
    %v586 = vmul.f32 %v552, %v575
    %v587 = vmul.f32 %v553, %v585
    %v589 = vperm.slane %v542, 0
    %v591 = vmul.f32 %v586, %v589
    %v592 = vmul.f32 %v587, %v589
    %v594 = vperm.slane %v543, 0
    %v596 = vadd.f32 %v591, %v594
    %v597 = vadd.f32 %v592, %v594
    %v598 = vld [vmem:[%s10] sm:$0xff]
    %v599 = vld [vmem:[%s10 + $0x8] sm:$0xff]
    %v600 = vld [vmem:[%s10 + $0x10] sm:$0xff]
    %v601 = vld [vmem:[%s10 + $0x18] sm:$0xff]
    %v602 = vld [vmem:[%s11] sm:$0x1]
    %v604 = vperm.slane %v602, 0
    %v607 = vsel %vm70, %v596, 0
    %v610 = vsel %vm70, %v597, 0
    %612 = vmatpush.msra.mxu0 0.0
    %613 = vmatpush.msra.mxu0 0.0
    %614 = vmatpush.msra.mxu0 0.0
    %615 = vmatpush.msra.mxu0 0.0
    %616 = vmatpush.msra.mxu0 0.0
    %617 = vmatpush.msra.mxu0 0.0
    %618 = vmatpush.msra.mxu0 0.0
    %619 = vmatpush.msra.mxu0 0.0
    %620 = vmatpush.msra.mxu0 0.0
    %621 = vmatpush.msra.mxu0 0.0
    %622 = vmatpush.msra.mxu0 0.0
    %623 = vmatpush.msra.mxu0 0.0
    %624 = vmatpush.msra.mxu0 %v601
    %625 = vmatpush.msra.mxu0 %v600
    %626 = vmatpush.msra.mxu0 %v599
    %627 = vmatpush.msra.mxu0 %v598
    %628 = vmatmul.f32.gmra.mxu0 %v607
    %v629 = vpop.f32.mrf.mxu0
    %v630 = vadd.f32 %v604, %v629
    %631 = vmatmul.f32.gmra.mxu0 %v610
    %v632 = vpop.f32.mrf.mxu0
    %v633 = vadd.f32 %v604, %v632
    %634 = vdwg.mxu0
    %v635 = vmul.f32 %v630, 0.5
    %v636 = vmul.f32 %v633, 0.5
    %v637 = vmul.f32 %v630, 0.70710677
    %v638 = vmul.f32 %v633, 0.70710677
    %vm639 = vcmp.ge.f32.partialorder %v637, 0.0
    %vm640 = vcmp.ge.f32.partialorder %v638, 0.0
    %v641 = vsel %vm639, 1.0, -1.0
    %v642 = vsel %vm640, 1.0, -1.0
    %v643 = vand.u32 2147483647, %v637
    %v644 = vand.u32 2147483647, %v638
    %v645 = vmul.f32 %v643, 0.3275911
    %v646 = vmul.f32 %v644, 0.3275911
    %v647 = vadd.f32 %v645, 1.0
    %v648 = vadd.f32 %v646, 1.0
    %v649 = vrcp.pop %v647
    %v650 = vmul.f32 %v647, %v649
    %v651 = vsub.f32 1.0, %v650
    %v652 = vmul.f32 %v649, %v651
    %v653 = vadd.f32 %v649, %v652
    %vm654 = vweird.f32 %v647
    %vm655 = vweird.f32 %v649
    %vm656 = vmor %vm654, %vm655
    %v657 = vsel %vm656, %v649, %v653
    %v658 = vand.u32 2147483647, %v647
    %vm659 = vcmp.eq.f32.partialorder %v658, 8.507059e+37
    %v660 = vand.u32 %v647, 2147483648
    %v661 = vor.u32 1.1754944e-38, %v660
    %v662 = vsel %vm659, %v661, %v657
    %v663 = vmul.f32 1.0, %v662
    %v664 = vrcp.pop %v648
    %v665 = vmul.f32 %v648, %v664
    %v666 = vsub.f32 1.0, %v665
    %v667 = vmul.f32 %v664, %v666
    %v668 = vadd.f32 %v664, %v667
    %vm669 = vweird.f32 %v648
    %vm670 = vweird.f32 %v664
    %vm671 = vmor %vm669, %vm670
    %v672 = vsel %vm671, %v664, %v668
    %v673 = vand.u32 2147483647, %v648
    %vm674 = vcmp.eq.f32.partialorder %v673, 8.507059e+37
    %v675 = vand.u32 %v648, 2147483648
    %v676 = vor.u32 1.1754944e-38, %v675
    %v677 = vsel %vm674, %v676, %v672
    %v678 = vmul.f32 1.0, %v677
    %v679 = vmul.f32 %v663, 1.0614054
    %v680 = vmul.f32 %v678, 1.0614054
    %v681 = vadd.f32 %v679, -1.4531521
    %v682 = vadd.f32 %v680, -1.4531521
    %v683 = vmul.f32 %v681, %v663
    %v684 = vmul.f32 %v682, %v678
    %v685 = vadd.f32 %v683, 1.4214138
    %v686 = vadd.f32 %v684, 1.4214138
    %v687 = vmul.f32 %v685, %v663
    %v688 = vmul.f32 %v686, %v678
    %v689 = vadd.f32 %v687, -0.28449672
    %v690 = vadd.f32 %v688, -0.28449672
    %v691 = vmul.f32 %v689, %v663
    %v692 = vmul.f32 %v690, %v678
    %v693 = vadd.f32 %v691, 0.2548296
    %v694 = vadd.f32 %v692, 0.2548296
    %v695 = vmul.f32 %v693, %v663
    %v696 = vmul.f32 %v694, %v678
    %v697 = vsub.f32 0.0, %v643
    %v698 = vsub.f32 0.0, %v644
    %v699 = vmul.f32 %v697, %v643
    %v700 = vmul.f32 %v698, %v644
    %v701 = vmul.f32 %v699, 1.442695
    %v702 = vpow.pop %v701
    %v703 = vmul.f32 %v700, 1.442695
    %v704 = vpow.pop %v703
    %v705 = vmul.f32 %v695, %v702
    %v706 = vmul.f32 %v696, %v704
    %v707 = vsub.f32 1.0, %v705
    %v708 = vsub.f32 1.0, %v706
    %v709 = vmul.f32 %v641, %v707
    %v710 = vmul.f32 %v642, %v708
    %v711 = vadd.f32 %v709, 1.0
    %v712 = vadd.f32 %v710, 1.0
    %v713 = vmul.f32 %v635, %v711
    %v714 = vmul.f32 %v636, %v712
    %v715 = vld [vmem:[%s12] sm:$0xff]
    %v716 = vld [vmem:[%s12 + $0x8] sm:$0xff]
    %v717 = vld [vmem:[%s12 + $0x10] sm:$0xff]
    %v718 = vld [vmem:[%s12 + $0x18] sm:$0xff]
    %v719 = vld [vmem:[%s12 + $0x20] sm:$0xff]
    %v720 = vld [vmem:[%s12 + $0x28] sm:$0xff]
    %v721 = vld [vmem:[%s12 + $0x30] sm:$0xff]
    %v722 = vld [vmem:[%s12 + $0x38] sm:$0xff]
    %v723 = vld [vmem:[%s13] sm:$0x1]
    %v725 = vperm.slane %v723, 0
    %vm727 = vcmask 523264
    %v729 = vsel %vm727, %v713, 0
    %v732 = vsel %vm727, %v714, 0
    %734 = vmatpush.msra.mxu0 0.0
    %735 = vmatpush.msra.mxu0 0.0
    %736 = vmatpush.msra.mxu0 0.0
    %737 = vmatpush.msra.mxu0 0.0
    %738 = vmatpush.msra.mxu0 0.0
    %739 = vmatpush.msra.mxu0 0.0
    %740 = vmatpush.msra.mxu0 0.0
    %741 = vmatpush.msra.mxu0 0.0
    %742 = vmatpush.msra.mxu0 %v722
    %743 = vmatpush.msra.mxu0 %v721
    %744 = vmatpush.msra.mxu0 %v720
    %745 = vmatpush.msra.mxu0 %v719
    %746 = vmatpush.msra.mxu0 %v718
    %747 = vmatpush.msra.mxu0 %v717
    %748 = vmatpush.msra.mxu0 %v716
    %749 = vmatpush.msra.mxu0 %v715
    %750 = vmatmul.f32.gmra.mxu0 %v729
    %v751 = vpop.f32.mrf.mxu0
    %v752 = vadd.f32 %v725, %v751
    %753 = vmatmul.f32.gmra.mxu0 %v732
    %v754 = vpop.f32.mrf.mxu0
    %v755 = vadd.f32 %v725, %v754
    %756 = vdwg.mxu0
    %v757 = vadd.f32 %v752, %v596
    %v758 = vadd.f32 %v755, %v597
    %v759 = vld [vmem:[%s14] sm:$0x1]
    %v760 = vld [vmem:[%s15] sm:$0x1]
    %v761 = vsel %vm70, %v757, 0.0
    %762 = vadd.xlane.f32.xlu0 %v761
    %v763 = vpop.xlane.xlu0 %762
    %v764 = vsel %vm70, %v758, 0.0
    %765 = vadd.xlane.f32.xlu0 %v764
    %v766 = vpop.xlane.xlu0 %765
    %v767 = vmul.f32 %v763, %v83
    %v768 = vmul.f32 %v766, %v83
    %v769 = vsub.f32 %v757, %v767
    %v770 = vsub.f32 %v758, %v768
    %v771 = vmul.f32 %v769, %v769
    %v772 = vmul.f32 %v770, %v770
    %v773 = vsel %vm70, %v771, 0.0
    %774 = vadd.xlane.f32.xlu0 %v773
    %v775 = vpop.xlane.xlu0 %774
    %v776 = vsel %vm70, %v772, 0.0
    %777 = vadd.xlane.f32.xlu0 %v776
    %v778 = vpop.xlane.xlu0 %777
    %v779 = vmul.f32 %v775, %v83
    %v780 = vmul.f32 %v778, %v83
    %v781 = vadd.f32 %v779, 1e-12
    %v782 = vadd.f32 %v780, 1e-12
    %v783 = vrsqrt.pop %v781
    %v784 = vmul.f32 %v783, %v781
    %v785 = vmul.f32 %v784, %v783
    %v786 = vmul.f32 0.5, %v785
    %v787 = vsub.f32 1.5, %v786
    %v788 = vmul.f32 %v783, %v787
    %vm789 = vweird.f32 %v781
    %vm790 = vweird.f32 %v783
    %vm791 = vmor %vm789, %vm790
    %v792 = vsel %vm791, %v783, %v788
    %v793 = vrsqrt.pop %v782
    %v794 = vmul.f32 %v793, %v782
    %v795 = vmul.f32 %v794, %v793
    %v796 = vmul.f32 0.5, %v795
    %v797 = vsub.f32 1.5, %v796
    %v798 = vmul.f32 %v793, %v797
    %vm799 = vweird.f32 %v782
    %vm800 = vweird.f32 %v793
    %vm801 = vmor %vm799, %vm800
    %v802 = vsel %vm801, %v793, %v798
    %v803 = vmul.f32 %v769, %v792
    %v804 = vmul.f32 %v770, %v802
    %v806 = vperm.slane %v759, 0
    %v808 = vmul.f32 %v803, %v806
    %v809 = vmul.f32 %v804, %v806
    %v811 = vperm.slane %v760, 0
    %v813 = vadd.f32 %v808, %v811
    %v814 = vadd.f32 %v809, %v811
    %s815 = scalar_lea.vmem %s4, 32
    %v816 = vld [vmem:[%s815] sm:$0xff]
    %v817 = vld [vmem:[%s815 + $0x8] sm:$0xff]
    %v818 = vld [vmem:[%s815 + $0x10] sm:$0xff]
    %v819 = vld [vmem:[%s815 + $0x18] sm:$0xff]
    %s820 = scalar_lea.vmem %s6, 32
    %v821 = vld [vmem:[%s820] sm:$0xff]
    %v822 = vld [vmem:[%s820 + $0x8] sm:$0xff]
    %v823 = vld [vmem:[%s820 + $0x10] sm:$0xff]
    %v824 = vld [vmem:[%s820 + $0x18] sm:$0xff]
    %s825 = scalar_lea.vmem %s5, 1
    %v826 = vld [vmem:[%s825] sm:$0x1]
    %v828 = vperm.slane %v826, 0
    %v831 = vsel %vm70, %v813, 0
    %v834 = vsel %vm70, %v814, 0
    %836 = vmatpush.msra.mxu0 0.0
    %837 = vmatpush.msra.mxu0 0.0
    %838 = vmatpush.msra.mxu0 0.0
    %839 = vmatpush.msra.mxu0 0.0
    %840 = vmatpush.msra.mxu0 0.0
    %841 = vmatpush.msra.mxu0 0.0
    %842 = vmatpush.msra.mxu0 0.0
    %843 = vmatpush.msra.mxu0 0.0
    %844 = vmatpush.msra.mxu0 0.0
    %845 = vmatpush.msra.mxu0 0.0
    %846 = vmatpush.msra.mxu0 0.0
    %847 = vmatpush.msra.mxu0 0.0
    %848 = vmatpush.msra.mxu0 %v819
    %849 = vmatpush.msra.mxu0 %v818
    %850 = vmatpush.msra.mxu0 %v817
    %851 = vmatpush.msra.mxu0 %v816
    %852 = vmatmul.f32.gmra.mxu0 %v831
    %v853 = vpop.f32.mrf.mxu0
    %v854 = vadd.f32 %v828, %v853
    %855 = vmatmul.f32.gmra.mxu0 %v834
    %v856 = vpop.f32.mrf.mxu0
    %v857 = vadd.f32 %v828, %v856
    %858 = vdwg.mxu0
    %860 = vrot.lane.b32.xlu0 %v854, 96
    %v861 = vpop.permute.xlu0 %860
    %v862 = vsel %vm180, %v854, 0
    %v864 = vsel %vm180, %v861, 0
    %866 = vmatpush.xpose.msra.mxu0 0.0
    %867 = vmatpush.xpose.msra.mxu0 0.0
    %868 = vmatpush.xpose.msra.mxu0 0.0
    %869 = vmatpush.xpose.msra.mxu0 0.0
    %870 = vmatpush.xpose.msra.mxu0 0.0
    %871 = vmatpush.xpose.msra.mxu0 0.0
    %872 = vmatpush.xpose.msra.mxu0 0.0
    %873 = vmatpush.xpose.msra.mxu0 0.0
    %874 = vmatpush.xpose.msra.mxu0 0.0
    %875 = vmatpush.xpose.msra.mxu0 0.0
    %876 = vmatpush.xpose.msra.mxu0 0.0
    %877 = vmatpush.xpose.msra.mxu0 0.0
    %878 = vmatpush.xpose.msra.mxu0 0.0
    %879 = vmatpush.xpose.msra.mxu0 0.0
    %880 = vmatpush.xpose.msra.mxu0 0.0
    %881 = vmatpush.xpose.msra.mxu0 %v864
    %882 = vmatmul.f32.gmra.mxu0 %v862
    %v883 = vpop.f32.mrf.mxu0
    %v884 = vadd.f32 %v175, %v883
    %885 = vdwg.mxu0
    %v886 = vsel %vm205, %v884, -inf
    %887 = vmax.xlane.f32.xlu0 %v886
    %v888 = vpop.xlane.xlu0 %887
    %v889 = vsub.f32 %v884, %v888
    %v890 = vmul.f32 %v889, 1.442695
    %v891 = vpow.pop %v890
    %v892 = vsel %vm205, %v891, 0.0
    %893 = vadd.xlane.f32.xlu0 %v892
    %v894 = vpop.xlane.xlu0 %893
    %v895 = vrcp.pop %v894
    %v896 = vmul.f32 %v891, %v895
    %897 = vrot.lane.b32.xlu0 %v854, 64
    %v898 = vpop.permute.xlu0 %897
    %v901 = vsel %vm205, %v896, 0
    %903 = vmatpush.msra.mxu0 0.0
    %904 = vmatpush.msra.mxu0 0.0
    %905 = vmatpush.msra.mxu0 0.0
    %906 = vmatpush.msra.mxu0 0.0
    %907 = vmatpush.msra.mxu0 0.0
    %908 = vmatpush.msra.mxu0 0.0
    %909 = vmatpush.msra.mxu0 0.0
    %910 = vmatpush.msra.mxu0 0.0
    %911 = vmatpush.msra.mxu0 0.0
    %912 = vmatpush.msra.mxu0 0.0
    %913 = vmatpush.msra.mxu0 0.0
    %914 = vmatpush.msra.mxu0 0.0
    %915 = vmatpush.msra.mxu0 0.0
    %916 = vmatpush.msra.mxu0 0.0
    %917 = vmatpush.msra.mxu0 0.0
    %918 = vmatpush.msra.mxu0 %v898
    %919 = vmatmul.f32.gmra.mxu0 %v901
    %v920 = vpop.f32.mrf.mxu0
    %v921 = vadd.f32 0.0, %v920
    %922 = vdwg.mxu0
    %923 = vrot.lane.b32.xlu0 %v854, 112
    %v924 = vpop.permute.xlu0 %923
    %925 = vrot.lane.b32.xlu0 %v854, 80
    %v926 = vpop.permute.xlu0 %925
    %v927 = vsel %vm180, %v924, 0
    %v929 = vsel %vm180, %v926, 0
    %931 = vmatpush.xpose.msra.mxu0 0.0
    %932 = vmatpush.xpose.msra.mxu0 0.0
    %933 = vmatpush.xpose.msra.mxu0 0.0
    %934 = vmatpush.xpose.msra.mxu0 0.0
    %935 = vmatpush.xpose.msra.mxu0 0.0
    %936 = vmatpush.xpose.msra.mxu0 0.0
    %937 = vmatpush.xpose.msra.mxu0 0.0
    %938 = vmatpush.xpose.msra.mxu0 0.0
    %939 = vmatpush.xpose.msra.mxu0 0.0
    %940 = vmatpush.xpose.msra.mxu0 0.0
    %941 = vmatpush.xpose.msra.mxu0 0.0
    %942 = vmatpush.xpose.msra.mxu0 0.0
    %943 = vmatpush.xpose.msra.mxu0 0.0
    %944 = vmatpush.xpose.msra.mxu0 0.0
    %945 = vmatpush.xpose.msra.mxu0 0.0
    %946 = vmatpush.xpose.msra.mxu0 %v929
    %947 = vmatmul.f32.gmra.mxu0 %v927
    %v948 = vpop.f32.mrf.mxu0
    %v949 = vadd.f32 %v175, %v948
    %950 = vdwg.mxu0
    %v951 = vsel %vm205, %v949, -inf
    %952 = vmax.xlane.f32.xlu0 %v951
    %v953 = vpop.xlane.xlu0 %952
    %v954 = vsub.f32 %v949, %v953
    %v955 = vmul.f32 %v954, 1.442695
    %v956 = vpow.pop %v955
    %v957 = vsel %vm205, %v956, 0.0
    %958 = vadd.xlane.f32.xlu0 %v957
    %v959 = vpop.xlane.xlu0 %958
    %v960 = vrcp.pop %v959
    %v961 = vmul.f32 %v956, %v960
    %962 = vrot.lane.b32.xlu0 %v854, 48
    %v963 = vpop.permute.xlu0 %962
    %v966 = vsel %vm205, %v961, 0
    %968 = vmatpush.msra.mxu0 0.0
    %969 = vmatpush.msra.mxu0 0.0
    %970 = vmatpush.msra.mxu0 0.0
    %971 = vmatpush.msra.mxu0 0.0
    %972 = vmatpush.msra.mxu0 0.0
    %973 = vmatpush.msra.mxu0 0.0
    %974 = vmatpush.msra.mxu0 0.0
    %975 = vmatpush.msra.mxu0 0.0
    %976 = vmatpush.msra.mxu0 0.0
    %977 = vmatpush.msra.mxu0 0.0
    %978 = vmatpush.msra.mxu0 0.0
    %979 = vmatpush.msra.mxu0 0.0
    %980 = vmatpush.msra.mxu0 0.0
    %981 = vmatpush.msra.mxu0 0.0
    %982 = vmatpush.msra.mxu0 0.0
    %983 = vmatpush.msra.mxu0 %v963
    %984 = vmatmul.f32.gmra.mxu0 %v966
    %v985 = vpop.f32.mrf.mxu0
    %v986 = vadd.f32 0.0, %v985
    %987 = vdwg.mxu0
    %v989 = vsel %vm180, %v986, 0
    %991 = vmatpush.msra.mxu0 0.0
    %992 = vmatpush.msra.mxu0 0.0
    %993 = vmatpush.msra.mxu0 0.0
    %994 = vmatpush.msra.mxu0 0.0
    %995 = vmatpush.msra.mxu0 0.0
    %996 = vmatpush.msra.mxu0 0.0
    %997 = vmatpush.msra.mxu0 0.0
    %998 = vmatpush.msra.mxu0 0.0
    %999 = vmatpush.msra.mxu0 0.0
    %1000 = vmatpush.msra.mxu0 0.0
    %1001 = vmatpush.msra.mxu0 0.0
    %1002 = vmatpush.msra.mxu0 0.0
    %1003 = vmatpush.msra.mxu0 0.0
    %1004 = vmatpush.msra.mxu0 0.0
    %1005 = vmatpush.msra.mxu0 %v824
    %1006 = vmatpush.msra.mxu0 %v823
    %1007 = vmatmul.f32.gmra.mxu0 %v989
    %v1008 = vpop.f32.mrf.mxu0
    %v1009 = vadd.f32 0.0, %v1008
    %1010 = vdwg.mxu0
    %v1012 = vsel %vm180, %v921, 0
    %1014 = vmatpush.msra.mxu0 0.0
    %1015 = vmatpush.msra.mxu0 0.0
    %1016 = vmatpush.msra.mxu0 0.0
    %1017 = vmatpush.msra.mxu0 0.0
    %1018 = vmatpush.msra.mxu0 0.0
    %1019 = vmatpush.msra.mxu0 0.0
    %1020 = vmatpush.msra.mxu0 0.0
    %1021 = vmatpush.msra.mxu0 0.0
    %1022 = vmatpush.msra.mxu0 0.0
    %1023 = vmatpush.msra.mxu0 0.0
    %1024 = vmatpush.msra.mxu0 0.0
    %1025 = vmatpush.msra.mxu0 0.0
    %1026 = vmatpush.msra.mxu0 0.0
    %1027 = vmatpush.msra.mxu0 0.0
    %1028 = vmatpush.msra.mxu0 %v822
    %1029 = vmatpush.msra.mxu0 %v821
    %1030 = vmatmul.f32.gmra.mxu0 %v1012
    %v1031 = vpop.f32.mrf.mxu0
    %v1032 = vadd.f32 %v1009, %v1031
    %1033 = vdwg.mxu0
    %1035 = vrot.lane.b32.xlu0 %v857, 96
    %v1036 = vpop.permute.xlu0 %1035
    %v1037 = vsel %vm180, %v857, 0
    %v1039 = vsel %vm180, %v1036, 0
    %1041 = vmatpush.xpose.msra.mxu0 0.0
    %1042 = vmatpush.xpose.msra.mxu0 0.0
    %1043 = vmatpush.xpose.msra.mxu0 0.0
    %1044 = vmatpush.xpose.msra.mxu0 0.0
    %1045 = vmatpush.xpose.msra.mxu0 0.0
    %1046 = vmatpush.xpose.msra.mxu0 0.0
    %1047 = vmatpush.xpose.msra.mxu0 0.0
    %1048 = vmatpush.xpose.msra.mxu0 0.0
    %1049 = vmatpush.xpose.msra.mxu0 0.0
    %1050 = vmatpush.xpose.msra.mxu0 0.0
    %1051 = vmatpush.xpose.msra.mxu0 0.0
    %1052 = vmatpush.xpose.msra.mxu0 0.0
    %1053 = vmatpush.xpose.msra.mxu0 0.0
    %1054 = vmatpush.xpose.msra.mxu0 0.0
    %1055 = vmatpush.xpose.msra.mxu0 0.0
    %1056 = vmatpush.xpose.msra.mxu0 %v1039
    %1057 = vmatmul.f32.gmra.mxu0 %v1037
    %v1058 = vpop.f32.mrf.mxu0
    %v1059 = vadd.f32 %v357, %v1058
    %1060 = vdwg.mxu0
    %v1061 = vsel %vm205, %v1059, -inf
    %1062 = vmax.xlane.f32.xlu0 %v1061
    %v1063 = vpop.xlane.xlu0 %1062
    %v1064 = vsub.f32 %v1059, %v1063
    %v1065 = vmul.f32 %v1064, 1.442695
    %v1066 = vpow.pop %v1065
    %v1067 = vsel %vm205, %v1066, 0.0
    %1068 = vadd.xlane.f32.xlu0 %v1067
    %v1069 = vpop.xlane.xlu0 %1068
    %v1070 = vrcp.pop %v1069
    %v1071 = vmul.f32 %v1066, %v1070
    %1072 = vrot.lane.b32.xlu0 %v857, 64
    %v1073 = vpop.permute.xlu0 %1072
    %v1076 = vsel %vm205, %v1071, 0
    %1078 = vmatpush.msra.mxu0 0.0
    %1079 = vmatpush.msra.mxu0 0.0
    %1080 = vmatpush.msra.mxu0 0.0
    %1081 = vmatpush.msra.mxu0 0.0
    %1082 = vmatpush.msra.mxu0 0.0
    %1083 = vmatpush.msra.mxu0 0.0
    %1084 = vmatpush.msra.mxu0 0.0
    %1085 = vmatpush.msra.mxu0 0.0
    %1086 = vmatpush.msra.mxu0 0.0
    %1087 = vmatpush.msra.mxu0 0.0
    %1088 = vmatpush.msra.mxu0 0.0
    %1089 = vmatpush.msra.mxu0 0.0
    %1090 = vmatpush.msra.mxu0 0.0
    %1091 = vmatpush.msra.mxu0 0.0
    %1092 = vmatpush.msra.mxu0 0.0
    %1093 = vmatpush.msra.mxu0 %v1073
    %1094 = vmatmul.f32.gmra.mxu0 %v1076
    %v1095 = vpop.f32.mrf.mxu0
    %v1096 = vadd.f32 0.0, %v1095
    %1097 = vdwg.mxu0
    %1098 = vrot.lane.b32.xlu0 %v857, 112
    %v1099 = vpop.permute.xlu0 %1098
    %1100 = vrot.lane.b32.xlu0 %v857, 80
    %v1101 = vpop.permute.xlu0 %1100
    %v1102 = vsel %vm180, %v1099, 0
    %v1104 = vsel %vm180, %v1101, 0
    %1106 = vmatpush.xpose.msra.mxu0 0.0
    %1107 = vmatpush.xpose.msra.mxu0 0.0
    %1108 = vmatpush.xpose.msra.mxu0 0.0
    %1109 = vmatpush.xpose.msra.mxu0 0.0
    %1110 = vmatpush.xpose.msra.mxu0 0.0
    %1111 = vmatpush.xpose.msra.mxu0 0.0
    %1112 = vmatpush.xpose.msra.mxu0 0.0
    %1113 = vmatpush.xpose.msra.mxu0 0.0
    %1114 = vmatpush.xpose.msra.mxu0 0.0
    %1115 = vmatpush.xpose.msra.mxu0 0.0
    %1116 = vmatpush.xpose.msra.mxu0 0.0
    %1117 = vmatpush.xpose.msra.mxu0 0.0
    %1118 = vmatpush.xpose.msra.mxu0 0.0
    %1119 = vmatpush.xpose.msra.mxu0 0.0
    %1120 = vmatpush.xpose.msra.mxu0 0.0
    %1121 = vmatpush.xpose.msra.mxu0 %v1104
    %1122 = vmatmul.f32.gmra.mxu0 %v1102
    %v1123 = vpop.f32.mrf.mxu0
    %v1124 = vadd.f32 %v357, %v1123
    %1125 = vdwg.mxu0
    %v1126 = vsel %vm205, %v1124, -inf
    %1127 = vmax.xlane.f32.xlu0 %v1126
    %v1128 = vpop.xlane.xlu0 %1127
    %v1129 = vsub.f32 %v1124, %v1128
    %v1130 = vmul.f32 %v1129, 1.442695
    %v1131 = vpow.pop %v1130
    %v1132 = vsel %vm205, %v1131, 0.0
    %1133 = vadd.xlane.f32.xlu0 %v1132
    %v1134 = vpop.xlane.xlu0 %1133
    %v1135 = vrcp.pop %v1134
    %v1136 = vmul.f32 %v1131, %v1135
    %1137 = vrot.lane.b32.xlu0 %v857, 48
    %v1138 = vpop.permute.xlu0 %1137
    %v1141 = vsel %vm205, %v1136, 0
    %1143 = vmatpush.msra.mxu0 0.0
    %1144 = vmatpush.msra.mxu0 0.0
    %1145 = vmatpush.msra.mxu0 0.0
    %1146 = vmatpush.msra.mxu0 0.0
    %1147 = vmatpush.msra.mxu0 0.0
    %1148 = vmatpush.msra.mxu0 0.0
    %1149 = vmatpush.msra.mxu0 0.0
    %1150 = vmatpush.msra.mxu0 0.0
    %1151 = vmatpush.msra.mxu0 0.0
    %1152 = vmatpush.msra.mxu0 0.0
    %1153 = vmatpush.msra.mxu0 0.0
    %1154 = vmatpush.msra.mxu0 0.0
    %1155 = vmatpush.msra.mxu0 0.0
    %1156 = vmatpush.msra.mxu0 0.0
    %1157 = vmatpush.msra.mxu0 0.0
    %1158 = vmatpush.msra.mxu0 %v1138
    %1159 = vmatmul.f32.gmra.mxu0 %v1141
    %v1160 = vpop.f32.mrf.mxu0
    %v1161 = vadd.f32 0.0, %v1160
    %1162 = vdwg.mxu0
    %v1164 = vsel %vm180, %v1161, 0
    %1166 = vmatpush.msra.mxu0 0.0
    %1167 = vmatpush.msra.mxu0 0.0
    %1168 = vmatpush.msra.mxu0 0.0
    %1169 = vmatpush.msra.mxu0 0.0
    %1170 = vmatpush.msra.mxu0 0.0
    %1171 = vmatpush.msra.mxu0 0.0
    %1172 = vmatpush.msra.mxu0 0.0
    %1173 = vmatpush.msra.mxu0 0.0
    %1174 = vmatpush.msra.mxu0 0.0
    %1175 = vmatpush.msra.mxu0 0.0
    %1176 = vmatpush.msra.mxu0 0.0
    %1177 = vmatpush.msra.mxu0 0.0
    %1178 = vmatpush.msra.mxu0 0.0
    %1179 = vmatpush.msra.mxu0 0.0
    %1180 = vmatpush.msra.mxu0 %v824
    %1181 = vmatpush.msra.mxu0 %v823
    %1182 = vmatmul.f32.gmra.mxu0 %v1164
    %v1183 = vpop.f32.mrf.mxu0
    %v1184 = vadd.f32 0.0, %v1183
    %1185 = vdwg.mxu0
    %v1187 = vsel %vm180, %v1096, 0
    %1189 = vmatpush.msra.mxu0 0.0
    %1190 = vmatpush.msra.mxu0 0.0
    %1191 = vmatpush.msra.mxu0 0.0
    %1192 = vmatpush.msra.mxu0 0.0
    %1193 = vmatpush.msra.mxu0 0.0
    %1194 = vmatpush.msra.mxu0 0.0
    %1195 = vmatpush.msra.mxu0 0.0
    %1196 = vmatpush.msra.mxu0 0.0
    %1197 = vmatpush.msra.mxu0 0.0
    %1198 = vmatpush.msra.mxu0 0.0
    %1199 = vmatpush.msra.mxu0 0.0
    %1200 = vmatpush.msra.mxu0 0.0
    %1201 = vmatpush.msra.mxu0 0.0
    %1202 = vmatpush.msra.mxu0 0.0
    %1203 = vmatpush.msra.mxu0 %v822
    %1204 = vmatpush.msra.mxu0 %v821
    %1205 = vmatmul.f32.gmra.mxu0 %v1187
    %v1206 = vpop.f32.mrf.mxu0
    %v1207 = vadd.f32 %v1184, %v1206
    %1208 = vdwg.mxu0
    %s1209 = scalar_lea.vmem %s7, 1
    %v1210 = vld [vmem:[%s1209] sm:$0x1]
    %v1212 = vperm.slane %v1210, 0
    %v1214 = vadd.f32 %v1032, %v1212
    %v1215 = vadd.f32 %v1207, %v1212
    %v1216 = vadd.f32 %v1214, %v813
    %v1217 = vadd.f32 %v1215, %v814
    %s1218 = scalar_lea.vmem %s8, 1
    %v1219 = vld [vmem:[%s1218] sm:$0x1]
    %s1220 = scalar_lea.vmem %s9, 1
    %v1221 = vld [vmem:[%s1220] sm:$0x1]
    %v1222 = vsel %vm70, %v1216, 0.0
    %1223 = vadd.xlane.f32.xlu0 %v1222
    %v1224 = vpop.xlane.xlu0 %1223
    %v1225 = vsel %vm70, %v1217, 0.0
    %1226 = vadd.xlane.f32.xlu0 %v1225
    %v1227 = vpop.xlane.xlu0 %1226
    %v1228 = vmul.f32 %v1224, %v83
    %v1229 = vmul.f32 %v1227, %v83
    %v1230 = vsub.f32 %v1216, %v1228
    %v1231 = vsub.f32 %v1217, %v1229
    %v1232 = vmul.f32 %v1230, %v1230
    %v1233 = vmul.f32 %v1231, %v1231
    %v1234 = vsel %vm70, %v1232, 0.0
    %1235 = vadd.xlane.f32.xlu0 %v1234
    %v1236 = vpop.xlane.xlu0 %1235
    %v1237 = vsel %vm70, %v1233, 0.0
    %1238 = vadd.xlane.f32.xlu0 %v1237
    %v1239 = vpop.xlane.xlu0 %1238
    %v1240 = vmul.f32 %v1236, %v83
    %v1241 = vmul.f32 %v1239, %v83
    %v1242 = vadd.f32 %v1240, 1e-12
    %v1243 = vadd.f32 %v1241, 1e-12
    %v1244 = vrsqrt.pop %v1242
    %v1245 = vmul.f32 %v1244, %v1242
    %v1246 = vmul.f32 %v1245, %v1244
    %v1247 = vmul.f32 0.5, %v1246
    %v1248 = vsub.f32 1.5, %v1247
    %v1249 = vmul.f32 %v1244, %v1248
    %vm1250 = vweird.f32 %v1242
    %vm1251 = vweird.f32 %v1244
    %vm1252 = vmor %vm1250, %vm1251
    %v1253 = vsel %vm1252, %v1244, %v1249
    %v1254 = vrsqrt.pop %v1243
    %v1255 = vmul.f32 %v1254, %v1243
    %v1256 = vmul.f32 %v1255, %v1254
    %v1257 = vmul.f32 0.5, %v1256
    %v1258 = vsub.f32 1.5, %v1257
    %v1259 = vmul.f32 %v1254, %v1258
    %vm1260 = vweird.f32 %v1243
    %vm1261 = vweird.f32 %v1254
    %vm1262 = vmor %vm1260, %vm1261
    %v1263 = vsel %vm1262, %v1254, %v1259
    %v1264 = vmul.f32 %v1230, %v1253
    %v1265 = vmul.f32 %v1231, %v1263
    %v1267 = vperm.slane %v1219, 0
    %v1269 = vmul.f32 %v1264, %v1267
    %v1270 = vmul.f32 %v1265, %v1267
    %v1272 = vperm.slane %v1221, 0
    %v1274 = vadd.f32 %v1269, %v1272
    %v1275 = vadd.f32 %v1270, %v1272
    %s1276 = scalar_lea.vmem %s10, 32
    %v1277 = vld [vmem:[%s1276] sm:$0xff]
    %v1278 = vld [vmem:[%s1276 + $0x8] sm:$0xff]
    %v1279 = vld [vmem:[%s1276 + $0x10] sm:$0xff]
    %v1280 = vld [vmem:[%s1276 + $0x18] sm:$0xff]
    %s1281 = scalar_lea.vmem %s11, 1
    %v1282 = vld [vmem:[%s1281] sm:$0x1]
    %v1284 = vperm.slane %v1282, 0
    %v1287 = vsel %vm70, %v1274, 0
    %v1290 = vsel %vm70, %v1275, 0
    %1292 = vmatpush.msra.mxu0 0.0
    %1293 = vmatpush.msra.mxu0 0.0
    %1294 = vmatpush.msra.mxu0 0.0
    %1295 = vmatpush.msra.mxu0 0.0
    %1296 = vmatpush.msra.mxu0 0.0
    %1297 = vmatpush.msra.mxu0 0.0
    %1298 = vmatpush.msra.mxu0 0.0
    %1299 = vmatpush.msra.mxu0 0.0
    %1300 = vmatpush.msra.mxu0 0.0
    %1301 = vmatpush.msra.mxu0 0.0
    %1302 = vmatpush.msra.mxu0 0.0
    %1303 = vmatpush.msra.mxu0 0.0
    %1304 = vmatpush.msra.mxu0 %v1280
    %1305 = vmatpush.msra.mxu0 %v1279
    %1306 = vmatpush.msra.mxu0 %v1278
    %1307 = vmatpush.msra.mxu0 %v1277
    %1308 = vmatmul.f32.gmra.mxu0 %v1287
    %v1309 = vpop.f32.mrf.mxu0
    %v1310 = vadd.f32 %v1284, %v1309
    %1311 = vmatmul.f32.gmra.mxu0 %v1290
    %v1312 = vpop.f32.mrf.mxu0
    %v1313 = vadd.f32 %v1284, %v1312
    %1314 = vdwg.mxu0
    %v1315 = vmul.f32 %v1310, 0.5
    %v1316 = vmul.f32 %v1313, 0.5
    %v1317 = vmul.f32 %v1310, 0.70710677
    %v1318 = vmul.f32 %v1313, 0.70710677
    %vm1319 = vcmp.ge.f32.partialorder %v1317, 0.0
    %vm1320 = vcmp.ge.f32.partialorder %v1318, 0.0
    %v1321 = vsel %vm1319, 1.0, -1.0
    %v1322 = vsel %vm1320, 1.0, -1.0
    %v1323 = vand.u32 2147483647, %v1317
    %v1324 = vand.u32 2147483647, %v1318
    %v1325 = vmul.f32 %v1323, 0.3275911
    %v1326 = vmul.f32 %v1324, 0.3275911
    %v1327 = vadd.f32 %v1325, 1.0
    %v1328 = vadd.f32 %v1326, 1.0
    %v1329 = vrcp.pop %v1327
    %v1330 = vmul.f32 %v1327, %v1329
    %v1331 = vsub.f32 1.0, %v1330
    %v1332 = vmul.f32 %v1329, %v1331
    %v1333 = vadd.f32 %v1329, %v1332
    %vm1334 = vweird.f32 %v1327
    %vm1335 = vweird.f32 %v1329
    %vm1336 = vmor %vm1334, %vm1335
    %v1337 = vsel %vm1336, %v1329, %v1333
    %v1338 = vand.u32 2147483647, %v1327
    %vm1339 = vcmp.eq.f32.partialorder %v1338, 8.507059e+37
    %v1340 = vand.u32 %v1327, 2147483648
    %v1341 = vor.u32 1.1754944e-38, %v1340
    %v1342 = vsel %vm1339, %v1341, %v1337
    %v1343 = vmul.f32 1.0, %v1342
    %v1344 = vrcp.pop %v1328
    %v1345 = vmul.f32 %v1328, %v1344
    %v1346 = vsub.f32 1.0, %v1345
    %v1347 = vmul.f32 %v1344, %v1346
    %v1348 = vadd.f32 %v1344, %v1347
    %vm1349 = vweird.f32 %v1328
    %vm1350 = vweird.f32 %v1344
    %vm1351 = vmor %vm1349, %vm1350
    %v1352 = vsel %vm1351, %v1344, %v1348
    %v1353 = vand.u32 2147483647, %v1328
    %vm1354 = vcmp.eq.f32.partialorder %v1353, 8.507059e+37
    %v1355 = vand.u32 %v1328, 2147483648
    %v1356 = vor.u32 1.1754944e-38, %v1355
    %v1357 = vsel %vm1354, %v1356, %v1352
    %v1358 = vmul.f32 1.0, %v1357
    %v1359 = vmul.f32 %v1343, 1.0614054
    %v1360 = vmul.f32 %v1358, 1.0614054
    %v1361 = vadd.f32 %v1359, -1.4531521
    %v1362 = vadd.f32 %v1360, -1.4531521
    %v1363 = vmul.f32 %v1361, %v1343
    %v1364 = vmul.f32 %v1362, %v1358
    %v1365 = vadd.f32 %v1363, 1.4214138
    %v1366 = vadd.f32 %v1364, 1.4214138
    %v1367 = vmul.f32 %v1365, %v1343
    %v1368 = vmul.f32 %v1366, %v1358
    %v1369 = vadd.f32 %v1367, -0.28449672
    %v1370 = vadd.f32 %v1368, -0.28449672
    %v1371 = vmul.f32 %v1369, %v1343
    %v1372 = vmul.f32 %v1370, %v1358
    %v1373 = vadd.f32 %v1371, 0.2548296
    %v1374 = vadd.f32 %v1372, 0.2548296
    %v1375 = vmul.f32 %v1373, %v1343
    %v1376 = vmul.f32 %v1374, %v1358
    %v1377 = vsub.f32 0.0, %v1323
    %v1378 = vsub.f32 0.0, %v1324
    %v1379 = vmul.f32 %v1377, %v1323
    %v1380 = vmul.f32 %v1378, %v1324
    %v1381 = vmul.f32 %v1379, 1.442695
    %v1382 = vpow.pop %v1381
    %v1383 = vmul.f32 %v1380, 1.442695
    %v1384 = vpow.pop %v1383
    %v1385 = vmul.f32 %v1375, %v1382
    %v1386 = vmul.f32 %v1376, %v1384
    %v1387 = vsub.f32 1.0, %v1385
    %v1388 = vsub.f32 1.0, %v1386
    %v1389 = vmul.f32 %v1321, %v1387
    %v1390 = vmul.f32 %v1322, %v1388
    %v1391 = vadd.f32 %v1389, 1.0
    %v1392 = vadd.f32 %v1390, 1.0
    %v1393 = vmul.f32 %v1315, %v1391
    %v1394 = vmul.f32 %v1316, %v1392
    %s1395 = scalar_lea.vmem %s12, 64
    %v1396 = vld [vmem:[%s1395] sm:$0xff]
    %v1397 = vld [vmem:[%s1395 + $0x8] sm:$0xff]
    %v1398 = vld [vmem:[%s1395 + $0x10] sm:$0xff]
    %v1399 = vld [vmem:[%s1395 + $0x18] sm:$0xff]
    %v1400 = vld [vmem:[%s1395 + $0x20] sm:$0xff]
    %v1401 = vld [vmem:[%s1395 + $0x28] sm:$0xff]
    %v1402 = vld [vmem:[%s1395 + $0x30] sm:$0xff]
    %v1403 = vld [vmem:[%s1395 + $0x38] sm:$0xff]
    %s1404 = scalar_lea.vmem %s13, 1
    %v1405 = vld [vmem:[%s1404] sm:$0x1]
    %v1407 = vperm.slane %v1405, 0
    %v1410 = vsel %vm727, %v1393, 0
    %v1413 = vsel %vm727, %v1394, 0
    %1415 = vmatpush.msra.mxu0 0.0
    %1416 = vmatpush.msra.mxu0 0.0
    %1417 = vmatpush.msra.mxu0 0.0
    %1418 = vmatpush.msra.mxu0 0.0
    %1419 = vmatpush.msra.mxu0 0.0
    %1420 = vmatpush.msra.mxu0 0.0
    %1421 = vmatpush.msra.mxu0 0.0
    %1422 = vmatpush.msra.mxu0 0.0
    %1423 = vmatpush.msra.mxu0 %v1403
    %1424 = vmatpush.msra.mxu0 %v1402
    %1425 = vmatpush.msra.mxu0 %v1401
    %1426 = vmatpush.msra.mxu0 %v1400
    %1427 = vmatpush.msra.mxu0 %v1399
    %1428 = vmatpush.msra.mxu0 %v1398
    %1429 = vmatpush.msra.mxu0 %v1397
    %1430 = vmatpush.msra.mxu0 %v1396
    %1431 = vmatmul.f32.gmra.mxu0 %v1410
    %v1432 = vpop.f32.mrf.mxu0
    %v1433 = vadd.f32 %v1407, %v1432
    %1434 = vmatmul.f32.gmra.mxu0 %v1413
    %v1435 = vpop.f32.mrf.mxu0
    %v1436 = vadd.f32 %v1407, %v1435
    %1437 = vdwg.mxu0
    %v1438 = vadd.f32 %v1433, %v1274
    %v1439 = vadd.f32 %v1436, %v1275
    %s1440 = scalar_lea.vmem %s14, 1
    %v1441 = vld [vmem:[%s1440] sm:$0x1]
    %s1442 = scalar_lea.vmem %s15, 1
    %v1443 = vld [vmem:[%s1442] sm:$0x1]
    %v1444 = vsel %vm70, %v1438, 0.0
    %1445 = vadd.xlane.f32.xlu0 %v1444
    %v1446 = vpop.xlane.xlu0 %1445
    %v1447 = vsel %vm70, %v1439, 0.0
    %1448 = vadd.xlane.f32.xlu0 %v1447
    %v1449 = vpop.xlane.xlu0 %1448
    %v1450 = vmul.f32 %v1446, %v83
    %v1451 = vmul.f32 %v1449, %v83
    %v1452 = vsub.f32 %v1438, %v1450
    %v1453 = vsub.f32 %v1439, %v1451
    %v1454 = vmul.f32 %v1452, %v1452
    %v1455 = vmul.f32 %v1453, %v1453
    %v1456 = vsel %vm70, %v1454, 0.0
    %1457 = vadd.xlane.f32.xlu0 %v1456
    %v1458 = vpop.xlane.xlu0 %1457
    %v1459 = vsel %vm70, %v1455, 0.0
    %1460 = vadd.xlane.f32.xlu0 %v1459
    %v1461 = vpop.xlane.xlu0 %1460
    %v1462 = vmul.f32 %v1458, %v83
    %v1463 = vmul.f32 %v1461, %v83
    %v1464 = vadd.f32 %v1462, 1e-12
    %v1465 = vadd.f32 %v1463, 1e-12
    %v1466 = vrsqrt.pop %v1464
    %v1467 = vmul.f32 %v1466, %v1464
    %v1468 = vmul.f32 %v1467, %v1466
    %v1469 = vmul.f32 0.5, %v1468
    %v1470 = vsub.f32 1.5, %v1469
    %v1471 = vmul.f32 %v1466, %v1470
    %vm1472 = vweird.f32 %v1464
    %vm1473 = vweird.f32 %v1466
    %vm1474 = vmor %vm1472, %vm1473
    %v1475 = vsel %vm1474, %v1466, %v1471
    %v1476 = vrsqrt.pop %v1465
    %v1477 = vmul.f32 %v1476, %v1465
    %v1478 = vmul.f32 %v1477, %v1476
    %v1479 = vmul.f32 0.5, %v1478
    %v1480 = vsub.f32 1.5, %v1479
    %v1481 = vmul.f32 %v1476, %v1480
    %vm1482 = vweird.f32 %v1465
    %vm1483 = vweird.f32 %v1476
    %vm1484 = vmor %vm1482, %vm1483
    %v1485 = vsel %vm1484, %v1476, %v1481
    %v1486 = vmul.f32 %v1452, %v1475
    %v1487 = vmul.f32 %v1453, %v1485
    %v1489 = vperm.slane %v1441, 0
    %v1491 = vmul.f32 %v1486, %v1489
    %v1492 = vmul.f32 %v1487, %v1489
    %v1494 = vperm.slane %v1443, 0
    %v1496 = vadd.f32 %v1491, %v1494
    %v1497 = vadd.f32 %v1492, %v1494
    %v1498 = vlaneseq
    %v1499 = vand.u32 %v1498, 127
    %v1500 = vlaneseq
    %v1501 = vshrl.u32 %v1500, 7
    %v1502 = vmul.u32 %v1501, 8
    %vm1503 = vcmp.eq.s32.totalorder %v1499, %v1502
    %v1504 = vsel %vm1503, 1, 0
    %v1505 = vcvt.s32.f32 %v1504
    %v1507 = vsel %vm180, %v1505, 0
    %1509 = vmatpush.msra.mxu0 0.0
    %1510 = vmatpush.msra.mxu0 0.0
    %1511 = vmatpush.msra.mxu0 0.0
    %1512 = vmatpush.msra.mxu0 0.0
    %1513 = vmatpush.msra.mxu0 0.0
    %1514 = vmatpush.msra.mxu0 0.0
    %1515 = vmatpush.msra.mxu0 0.0
    %1516 = vmatpush.msra.mxu0 0.0
    %1517 = vmatpush.msra.mxu0 0.0
    %1518 = vmatpush.msra.mxu0 0.0
    %1519 = vmatpush.msra.mxu0 0.0
    %1520 = vmatpush.msra.mxu0 0.0
    %1521 = vmatpush.msra.mxu0 0.0
    %1522 = vmatpush.msra.mxu0 0.0
    %1523 = vmatpush.msra.mxu0 %v1497
    %1524 = vmatpush.msra.mxu0 %v1496
    %1525 = vmatmul.f32.gmra.mxu0 %v1507
    %v1526 = vpop.f32.mrf.mxu0
    %v1527 = vadd.f32 0.0, %v1526
    %1528 = vdwg.mxu0
    %v1529 = vld [vmem:[%s16] sm:$0xff]
    %v1530 = vld [vmem:[%s16 + $0x8] sm:$0xff]
    %v1531 = vld [vmem:[%s16 + $0x10] sm:$0xff]
    %v1532 = vld [vmem:[%s16 + $0x18] sm:$0xff]
    %v1533 = vld [vmem:[%s17] sm:$0x1]
    %v1535 = vperm.slane %v1533, 0
    %v1538 = vsel %vm70, %v1527, 0
    %1540 = vmatpush.msra.mxu0 0.0
    %1541 = vmatpush.msra.mxu0 0.0
    %1542 = vmatpush.msra.mxu0 0.0
    %1543 = vmatpush.msra.mxu0 0.0
    %1544 = vmatpush.msra.mxu0 0.0
    %1545 = vmatpush.msra.mxu0 0.0
    %1546 = vmatpush.msra.mxu0 0.0
    %1547 = vmatpush.msra.mxu0 0.0
    %1548 = vmatpush.msra.mxu0 0.0
    %1549 = vmatpush.msra.mxu0 0.0
    %1550 = vmatpush.msra.mxu0 0.0
    %1551 = vmatpush.msra.mxu0 0.0
    %1552 = vmatpush.msra.mxu0 %v1532
    %1553 = vmatpush.msra.mxu0 %v1531
    %1554 = vmatpush.msra.mxu0 %v1530
    %1555 = vmatpush.msra.mxu0 %v1529
    %1556 = vmatmul.f32.gmra.mxu0 %v1538
    %v1557 = vpop.f32.mrf.mxu0
    %v1558 = vadd.f32 %v1535, %v1557
    %1559 = vdwg.mxu0
    %v1560 = vtanh.pop %v1558
    %v1561 = vld [vmem:[%s18] sm:$0xff]
    %v1562 = vld [vmem:[%s18 + $0x8] sm:$0xff]
    %v1563 = vld [vmem:[%s18 + $0x10] sm:$0xff]
    %v1564 = vld [vmem:[%s18 + $0x18] sm:$0xff]
    %v1565 = vld [vmem:[%s19] sm:$0x1]
    %v1567 = vperm.slane %v1565, 0
    %v1570 = vsel %vm70, %v1560, 0
    %1572 = vmatpush.msra.mxu0 0.0
    %1573 = vmatpush.msra.mxu0 0.0
    %1574 = vmatpush.msra.mxu0 0.0
    %1575 = vmatpush.msra.mxu0 0.0
    %1576 = vmatpush.msra.mxu0 0.0
    %1577 = vmatpush.msra.mxu0 0.0
    %1578 = vmatpush.msra.mxu0 0.0
    %1579 = vmatpush.msra.mxu0 0.0
    %1580 = vmatpush.msra.mxu0 0.0
    %1581 = vmatpush.msra.mxu0 0.0
    %1582 = vmatpush.msra.mxu0 0.0
    %1583 = vmatpush.msra.mxu0 0.0
    %1584 = vmatpush.msra.mxu0 %v1564
    %1585 = vmatpush.msra.mxu0 %v1563
    %1586 = vmatpush.msra.mxu0 %v1562
    %1587 = vmatpush.msra.mxu0 %v1561
    %1588 = vmatmul.f32.gmra.mxu0 %v1570
    %v1589 = vpop.f32.mrf.mxu0
    %v1590 = vadd.f32 %v1567, %v1589
    %1591 = vdwg.mxu0
    %vm1592 = vcmask 9216
    %1593 = vst.msk [vmem:[#allocation2] sm:$0x3] %vm1592, %v1590
    // Predicated region
    $region82: #{bert_sst2_forward.1} parent=1 // pred_check
      _
    $region83: #{bert_sst2_forward.1} parent=1 // pred_check_branch
      %1595 = sbr.rel (0) target = $region85
    $region84: #{bert_sst2_forward.1} parent=1 // pred_region
      %1597 = vsyncadd [#allocation3], 0
      %s1599 = sshll.u32 [#allocation2], 4
      %s1600 = int_to_ptr.vmem [resolvable:$true] %s1599
      %s1601 = sshll.u32 %s20, 4
      %s1602 = int_to_ptr.hbm [resolvable:$true] %s1601
      %1604 = dma.vmem_to_hbm [thread:$0]  %s1600, 32, %s1602, [#allocation3]
    $region85: #{bert_sst2_forward.1} parent=1 // pred_fallthru
      _
    // Predicated region
    $region86: #{bert_sst2_forward.1} parent=1 // pred_check
      _
    $region87: #{bert_sst2_forward.1} parent=1 // pred_check_branch
      %1606 = sbr.rel (0) target = $region89
    $region88: #{bert_sst2_forward.1} parent=1 // pred_region
      %1608 = dma.done [#allocation3], 32
    $region89: #{bert_sst2_forward.1} parent=1 // pred_fallthru
      _
    %1609 = vsyncpa [#allocation3], 1

</llo_original>
